<compile_context>
chip_gen: v5e
topology: v5e:2x2
jax: 0.10.0
libtpu: 0.0.40
codegen_flags: <defaults>
</compile_context>

<pallas_src>
import jax
import jax.numpy as jnp
from jax.experimental import pallas as pl
from jax.experimental.pallas import tpu as pltpu


def _round_up(x, m):
    return ((x + m - 1) // m) * m


def _vnet_kernel(x_ref, w1_ref, b1_ref, w2_ref, b2_ref, w3_ref, b3_ref, v_ref):
    # fc1 + relu: cast the f32 activation tile to bf16 in-kernel (VPU filler
    # hidden under the MXU) -> single f32 pass over x in HBM.
    x_bf = x_ref[...].astype(jnp.bfloat16)
    h1 = jnp.dot(x_bf, w1_ref[...], preferred_element_type=jnp.float32)
    h1 = jnp.maximum(h1 + b1_ref[...], 0.0)
    # fc2 + relu (bf16 x bf16 -> f32 accumulate on the MXU).
    h2 = jnp.dot(h1.astype(w2_ref.dtype), w2_ref[...],
                 preferred_element_type=jnp.float32)
    h2 = jnp.maximum(h2 + b2_ref[...], 0.0)
    # value head: (TB,128) @ (128,1) as a VPU multiply + lane reduction.
    v = jnp.sum(h2 * w3_ref[...], axis=-1, keepdims=True)      # (TB, 1)
    v_ref[...] = jnp.tanh(v + b3_ref[...]).astype(v_ref.dtype)


def splendor_vnet_forward(x, params, *, max_batch_tile=512):
    """x: (B, C, R, Cols) float32; params: dict of (in,out) weights / (1,out) biases."""
    B = x.shape[0]
    D = x.shape[1] * x.shape[2] * x.shape[3]
    x_flat = x.reshape(B, D).astype(jnp.float32)   # same as torch x.view(-1, C*R*Cols)

    h2_dim = params["w2"].shape[1]

    # Align the contraction (lane) dim to 128: zero-pad K on both operands
    # (numerically exact).  D = 1024 in the example -> no-op.
    d_pad = _round_up(D, 128)
    w1 = params["w1"].astype(jnp.bfloat16)                     # (D, 512)
    if d_pad != D:
        x_flat = jnp.pad(x_flat, ((0, 0), (0, d_pad - D)))
        w1 = jnp.pad(w1, ((0, d_pad - D), (0, 0)))

    w2 = params["w2"].astype(jnp.bfloat16)                     # (512, 128)
    w3 = params["w3"].reshape(1, h2_dim).astype(jnp.float32)   # (1, 128) row for VPU reduce
    b1 = params["b1"].astype(jnp.float32)
    b2 = params["b2"].astype(jnp.float32)
    b3 = params["b3"].astype(jnp.float32)

    # Batch tile: multiple of 16 sublanes (bf16 packing, full-height MXU M),
    # capped so batches >= 32 always yield >= 2 grid steps (v7x megacore).
    tb = min(max_batch_tile, _round_up(B, 16))
    if B >= 32:
        tb = min(tb, _round_up(pl.cdiv(B, 2), 16))
    num_tiles = pl.cdiv(B, tb)   # ragged last tile handled by Pallas masking

    resident = lambda shape: pl.BlockSpec(shape, lambda i: (0, 0))

    return pl.pallas_call(
        _vnet_kernel,
        out_shape=jax.ShapeDtypeStruct((B, 1), jnp.float32),
        grid=(num_tiles,),
        in_specs=[
            pl.BlockSpec((tb, d_pad), lambda i: (i, 0)),   # x tile, pipelined over batch
            resident(w1.shape), resident(b1.shape),
            resident(w2.shape), resident(b2.shape),
            resident(w3.shape), resident(b3.shape),
        ],
        out_specs=pl.BlockSpec((tb, 1), lambda i: (i, 0)),
        compiler_params=pltpu.CompilerParams(
            dimension_semantics=("parallel",),
            vmem_limit_bytes=32 * 1024 * 1024,
        ),
    )(x_flat, w1, b1, w2, b2, w3, b3)


def init_params(key, in_dim, h1=512, h2=128):
    # Deterministic synthetic init (uniform, roughly torch's default
    # kaiming-uniform scale 1/sqrt(fan_in)); stored as (in, out).
    ks = jax.random.split(key, 6)

    def u(k, shape, fan_in):
        bound = 1.0 / jnp.sqrt(fan_in)
        return jax.random.uniform(k, shape, jnp.float32, -bound, bound)

    return {
        "w1": u(ks[0], (in_dim, h1), in_dim),
        "b1": u(ks[1], (1, h1), in_dim),
        "w2": u(ks[2], (h1, h2), h1),
        "b2": u(ks[3], (1, h2), h1),
        "w3": u(ks[4], (h2, 1), h2),
        "b3": u(ks[5], (1, 1), h2),
    }


def reference_forward(x, params):
    # Pure-f32 reference matching the PyTorch module's math.
    B = x.shape[0]
    xf = x.reshape(B, -1)
    h1 = jnp.maximum(xf @ params["w1"] + params["b1"], 0.0)
    h2 = jnp.maximum(h1 @ params["w2"] + params["b2"], 0.0)
    return jnp.tanh(h2 @ params["w3"] + params["b3"])


if __name__ == "__main__":
    # game.getStateSize() -> (channels, rows, cols); small synthetic shapes.
    B, C, R, Cols = 2, 4, 16, 16
    key = jax.random.PRNGKey(0)
    kx, kp = jax.random.split(key)
    x = jax.random.normal(kx, (B, C, R, Cols), jnp.float32)
    params = init_params(kp, C * R * Cols)

    v = splendor_vnet_forward(x, params)
    v = jax.block_until_ready(v)

    v_ref = reference_forward(x, params)
    assert v.shape == (B, 1)
    # bf16 matmul inputs with f32 accumulation -> compare at bf16-level tolerance.
    assert jnp.allclose(v, v_ref, atol=2e-2, rtol=2e-2)
    print("KERNEL_OK")
</pallas_src>

<mosaic_0001>
module attributes {stable_mosaic.version = 11 : i64} {
  func.func @_vnet_kernel(%arg0: i32, %arg1: memref<16x1024xf32, #tpu.memory_space<vmem>>, %arg2: memref<1024x512xbf16, #tpu.memory_space<vmem>>, %arg3: memref<1x512xf32, #tpu.memory_space<vmem>>, %arg4: memref<512x128xbf16, #tpu.memory_space<vmem>>, %arg5: memref<1x128xf32, #tpu.memory_space<vmem>>, %arg6: memref<1x128xf32, #tpu.memory_space<vmem>>, %arg7: memref<1x1xf32, #tpu.memory_space<vmem>>, %arg8: memref<16x1xf32, #tpu.memory_space<vmem>>) attributes {dimension_semantics = [#tpu.dimension_semantics<parallel>], iteration_bounds = array<i64: 1>, scalar_prefetch = 0 : i64, scratch_operands = 0 : i64, tpu.core_type = #tpu.core_type<tc>, window_params = [{transform_indices = @transform_0, window_bounds = array<i64: 16, 1024>}, {pipeline_mode = #tpu.pipeline_mode<synchronous>, transform_indices = @transform_1, window_bounds = array<i64: 1024, 512>}, {pipeline_mode = #tpu.pipeline_mode<synchronous>, transform_indices = @transform_2, window_bounds = array<i64: 1, 512>}, {pipeline_mode = #tpu.pipeline_mode<synchronous>, transform_indices = @transform_3, window_bounds = array<i64: 512, 128>}, {pipeline_mode = #tpu.pipeline_mode<synchronous>, transform_indices = @transform_4, window_bounds = array<i64: 1, 128>}, {pipeline_mode = #tpu.pipeline_mode<synchronous>, transform_indices = @transform_5, window_bounds = array<i64: 1, 128>}, {pipeline_mode = #tpu.pipeline_mode<synchronous>, transform_indices = @transform_6, window_bounds = array<i64: 1, 1>}, {transform_indices = @transform_7, window_bounds = array<i64: 16, 1>}]} {
    %c0 = arith.constant 0 : index
    %c0_0 = arith.constant 0 : index
    %0 = vector.load %arg1[%c0, %c0_0] : memref<16x1024xf32, #tpu.memory_space<vmem>>, vector<16x1024xf32>
    %1 = arith.truncf %0 : vector<16x1024xf32> to vector<16x1024xbf16>
    %c0_1 = arith.constant 0 : index
    %c0_2 = arith.constant 0 : index
    %2 = vector.load %arg2[%c0_1, %c0_2] : memref<1024x512xbf16, #tpu.memory_space<vmem>>, vector<1024x512xbf16>
    %cst = arith.constant dense<0.000000e+00> : vector<16x512xf32>
    %3 = tpu.matmul %1, %2, %cst {dimension_numbers = #tpu.dot_dimension_numbers<[1], [0], [0], [1], [0, 0, 1, 1], [], []>} : vector<16x1024xbf16>, vector<1024x512xbf16>, vector<16x512xf32> -> vector<16x512xf32>
    %c0_3 = arith.constant 0 : index
    %c0_4 = arith.constant 0 : index
    %4 = vector.load %arg3[%c0_3, %c0_4] : memref<1x512xf32, #tpu.memory_space<vmem>>, vector<1x512xf32>
    %5 = vector.broadcast %4 : vector<1x512xf32> to vector<16x512xf32>
    %6 = arith.addf %3, %5 : vector<16x512xf32>
    %cst_5 = arith.constant 0.000000e+00 : f32
    %7 = vector.broadcast %cst_5 : f32 to vector<16x512xf32>
    %8 = arith.maximumf %6, %7 : vector<16x512xf32>
    %9 = arith.truncf %8 : vector<16x512xf32> to vector<16x512xbf16>
    %c0_6 = arith.constant 0 : index
    %c0_7 = arith.constant 0 : index
    %10 = vector.load %arg4[%c0_6, %c0_7] : memref<512x128xbf16, #tpu.memory_space<vmem>>, vector<512x128xbf16>
    %cst_8 = arith.constant dense<0.000000e+00> : vector<16x128xf32>
    %11 = tpu.matmul %9, %10, %cst_8 {dimension_numbers = #tpu.dot_dimension_numbers<[1], [0], [0], [1], [0, 0, 1, 1], [], []>} : vector<16x512xbf16>, vector<512x128xbf16>, vector<16x128xf32> -> vector<16x128xf32>
    %c0_9 = arith.constant 0 : index
    %c0_10 = arith.constant 0 : index
    %12 = vector.load %arg5[%c0_9, %c0_10] : memref<1x128xf32, #tpu.memory_space<vmem>>, vector<1x128xf32>
    %13 = vector.broadcast %12 : vector<1x128xf32> to vector<16x128xf32>
    %14 = arith.addf %11, %13 : vector<16x128xf32>
    %cst_11 = arith.constant 0.000000e+00 : f32
    %15 = vector.broadcast %cst_11 : f32 to vector<16x128xf32>
    %16 = arith.maximumf %14, %15 : vector<16x128xf32>
    %c0_12 = arith.constant 0 : index
    %c0_13 = arith.constant 0 : index
    %17 = vector.load %arg6[%c0_12, %c0_13] : memref<1x128xf32, #tpu.memory_space<vmem>>, vector<1x128xf32>
    %18 = vector.broadcast %17 : vector<1x128xf32> to vector<16x128xf32>
    %19 = arith.mulf %16, %18 : vector<16x128xf32>
    %cst_14 = arith.constant dense<0.000000e+00> : vector<16xf32>
    %20 = vector.multi_reduction <add>, %19, %cst_14 [1] : vector<16x128xf32> to vector<16xf32>
    %21 = vector.shape_cast %20 : vector<16xf32> to vector<16x1xf32>
    %c0_15 = arith.constant 0 : index
    %c0_16 = arith.constant 0 : index
    %22 = vector.load %arg7[%c0_15, %c0_16] : memref<1x1xf32, #tpu.memory_space<vmem>>, vector<1x1xf32>
    %23 = vector.broadcast %22 : vector<1x1xf32> to vector<16x1xf32>
    %24 = arith.addf %21, %23 : vector<16x1xf32>
    %25 = math.tanh %24 : vector<16x1xf32>
    %c0_17 = arith.constant 0 : index
    %c0_18 = arith.constant 0 : index
    %26 = vector.load %arg8[%c0_17, %c0_18] : memref<16x1xf32, #tpu.memory_space<vmem>>, vector<16x1xf32>
    tpu.vector_store %arg8[%c0_17, %c0_18], %25 {strides = array<i32>} : memref<16x1xf32, #tpu.memory_space<vmem>>, vector<16x1xf32>,
    return
  }
  func.func @transform_0(%arg0: i32) -> (i32, i32) {
    %c0_i32 = arith.constant 0 : i32
    %c0_i32_0 = arith.constant 0 : i32
    return %arg0, %c0_i32 : i32, i32
  }
  func.func @transform_1(%arg0: i32) -> (i32, i32) {
    %c0_i32 = arith.constant 0 : i32
    %c0_i32_0 = arith.constant 0 : i32
    %c0_i32_1 = arith.constant 0 : i32
    return %c0_i32, %c0_i32_0 : i32, i32
  }
  func.func @transform_2(%arg0: i32) -> (i32, i32) {
    %c0_i32 = arith.constant 0 : i32
    %c0_i32_0 = arith.constant 0 : i32
    %c0_i32_1 = arith.constant 0 : i32
    return %c0_i32, %c0_i32_0 : i32, i32
  }
  func.func @transform_3(%arg0: i32) -> (i32, i32) {
    %c0_i32 = arith.constant 0 : i32
    %c0_i32_0 = arith.constant 0 : i32
    %c0_i32_1 = arith.constant 0 : i32
    return %c0_i32, %c0_i32_0 : i32, i32
  }
  func.func @transform_4(%arg0: i32) -> (i32, i32) {
    %c0_i32 = arith.constant 0 : i32
    %c0_i32_0 = arith.constant 0 : i32
    %c0_i32_1 = arith.constant 0 : i32
    return %c0_i32, %c0_i32_0 : i32, i32
  }
  func.func @transform_5(%arg0: i32) -> (i32, i32) {
    %c0_i32 = arith.constant 0 : i32
    %c0_i32_0 = arith.constant 0 : i32
    %c0_i32_1 = arith.constant 0 : i32
    return %c0_i32, %c0_i32_0 : i32, i32
  }
  func.func @transform_6(%arg0: i32) -> (i32, i32) {
    %c0_i32 = arith.constant 0 : i32
    %c0_i32_0 = arith.constant 0 : i32
    %c0_i32_1 = arith.constant 0 : i32
    return %c0_i32, %c0_i32_0 : i32, i32
  }
  func.func @transform_7(%arg0: i32) -> (i32, i32) {
    %c0_i32 = arith.constant 0 : i32
    %c0_i32_0 = arith.constant 0 : i32
    return %arg0, %c0_i32 : i32, i32
  }
}

</mosaic_0001>

<llo_original>
// kernel: tpu_custom_call.1
$region0: #{tpu_custom_call.1}
  #allocation0 [shape = 'u32[]', space=smem, size = 0x4, offset = 0x4, fixed_abs, tag = 'smem constant byte address 0x4 - core index']
  #allocation1 [shape = 'u32[72,128]{1,0:T(1,128)}', space=vmem, size = 0x9000, scoped, tag = 'internal scratch']
  #allocation2 [shape = 'f32[1,1]{1,0:T(1,128)S(1)}', space=vmem, size = 0x200, scoped, tag = 'scoped memory for tpu_custom_call.1']
  %s0 = inlined_call_operand.hbm [shape: f32[2,1024], index: 0, kind: input, shape index: {}]
  %s1 = inlined_call_operand.hbm [shape: bf16[1024,512], index: 1, kind: input, shape index: {}]
  %s2 = inlined_call_operand.hbm [shape: f32[1,512], index: 2, kind: input, shape index: {}]
  %s3 = inlined_call_operand.hbm [shape: bf16[512,128], index: 3, kind: input, shape index: {}]
  %s4 = inlined_call_operand.vmem [shape: f32[1,128], index: 4, kind: input, shape index: {}]
  %s5 = inlined_call_operand.vmem [shape: f32[1,128], index: 5, kind: input, shape index: {}]
  %s6 = inlined_call_operand.<no memory space> [shape: f32[1,1], index: 6, kind: input, shape index: {}]
  %s7 = inlined_call_operand.vmem [shape: f32[2,1], index: 7, kind: output, shape index: {}]
  %s8 = sld [smem:[#allocation0]]
  $region84: #{tpu_custom_call.1} parent=0
    _
  %s10 = ssub.s32 1, %s8
  %s11 = scalar_select 0, %s10, %s8
  %v12 = vstv %s6
  %13 = vst [vmem:[#allocation2] sm:$0x1] %v12
  $region1: #{tpu_custom_call.1} parent=0
    #allocation3 [shape = 'u8[65536]{0}', space=vmem, size = 0x10000, scoped, tag = 'input window, operand 0, single buffered']
    #allocation4 [shape = 's32[1]{0}', space=sflag, size = 0x4, scoped, tag = 'scoped memory for tpu_custom_call.1']
    #allocation5 [shape = 'u8[1048576]{0}', space=vmem, size = 0x100000, scoped, tag = 'input window, operand 1, single buffered']
    #allocation6 [shape = 's32[1]{0}', space=sflag, size = 0x4, scoped, tag = 'scoped memory for tpu_custom_call.1']
    #allocation7 [shape = 'u8[2048]{0}', space=vmem, size = 0x800, scoped, tag = 'input window, operand 2, single buffered']
    #allocation8 [shape = 'u8[131072]{0}', space=vmem, size = 0x20000, scoped, tag = 'input window, operand 3, single buffered']
    #allocation9 [shape = 's32[1]{0}', space=sflag, size = 0x4, scoped, tag = 'scoped memory for tpu_custom_call.1']
    #allocation10 [shape = 'u8[8192]{0}', space=vmem, size = 0x2000, scoped, tag = 'output window, operand 0, single buffered']
    %14 = vsyncpa [#allocation4], 0
    %15 = vsyncpa [#allocation6], 0
    %16 = vsyncpa [#allocation9], 0
    // Predicated region
    $region2: #{tpu_custom_call.1} parent=1 // pred_check
      _
    $region3: #{tpu_custom_call.1} parent=1 // pred_check_branch
      %18 = sbr.rel (0) target = $region5
    $region4: #{tpu_custom_call.1} parent=1 // pred_region
      %20 = vsyncadd [#allocation4], 1792
      %s21 = sshll.u32 %s0, 4
      %s22 = int_to_ptr.hbm [resolvable:$true] %s21
      %s23 = sshll.u32 [#allocation3], 4
      %s24 = int_to_ptr.vmem [resolvable:$true] %s23
      %29 = dma.hbm_to_vmem [thread:$0]  %s22, 256, %s24, [#allocation4], 256, 256, 16
    $region5: #{tpu_custom_call.1} parent=1 // pred_fallthru
      _
    // Predicated region
    $region6: #{tpu_custom_call.1} parent=1 // pred_check
      _
    $region7: #{tpu_custom_call.1} parent=1 // pred_check_branch
      %31 = sbr.rel (0) target = $region9
    $region8: #{tpu_custom_call.1} parent=1 // pred_region
      %33 = vsyncadd [#allocation6], 0
      %s34 = sshll.u32 %s1, 4
      %s35 = int_to_ptr.hbm [resolvable:$true] %s34
      %s36 = sshll.u32 [#allocation5], 4
      %s37 = int_to_ptr.vmem [resolvable:$true] %s36
      %42 = dma.hbm_to_vmem [thread:$0]  %s35, 32768, %s37, [#allocation6], 256, 256, 16
    $region9: #{tpu_custom_call.1} parent=1 // pred_fallthru
      _
    // Predicated region
    $region10: #{tpu_custom_call.1} parent=1 // pred_check
      _
    $region11: #{tpu_custom_call.1} parent=1 // pred_check_branch
      %44 = sbr.rel (0) target = $region13
    $region12: #{tpu_custom_call.1} parent=1 // pred_region
      %46 = vsyncadd [#allocation6], 0
      %s48 = sshll.u32 %s2, 4
      %s49 = int_to_ptr.hbm [resolvable:$true] %s48
      %s50 = sshll.u32 [#allocation7], 4
      %s51 = int_to_ptr.vmem [resolvable:$true] %s50
      %53 = dma.hbm_to_vmem [thread:$0]  %s49, 64, %s51, [#allocation6]
    $region13: #{tpu_custom_call.1} parent=1 // pred_fallthru
      _
    // Predicated region
    $region14: #{tpu_custom_call.1} parent=1 // pred_check
      _
    $region15: #{tpu_custom_call.1} parent=1 // pred_check_branch
      %55 = sbr.rel (0) target = $region17
    $region16: #{tpu_custom_call.1} parent=1 // pred_region
      %57 = vsyncadd [#allocation9], 0
      %s58 = sshll.u32 %s3, 4
      %s59 = int_to_ptr.hbm [resolvable:$true] %s58
      %s60 = sshll.u32 [#allocation8], 4
      %s61 = int_to_ptr.vmem [resolvable:$true] %s60
      %66 = dma.hbm_to_vmem [thread:$0]  %s59, 4096, %s61, [#allocation9], 64, 64, 4
    $region17: #{tpu_custom_call.1} parent=1 // pred_fallthru
      _
    // Predicated region
    $region18: #{tpu_custom_call.1} parent=1 // pred_check
      _
    $region19: #{tpu_custom_call.1} parent=1 // pred_check_branch
      %68 = sbr.rel (0) target = $region21
    $region20: #{tpu_custom_call.1} parent=1 // pred_region
      _
    $region21: #{tpu_custom_call.1} parent=1 // pred_fallthru
      _
    // Predicated region
    $region22: #{tpu_custom_call.1} parent=1 // pred_check
      _
    $region23: #{tpu_custom_call.1} parent=1 // pred_check_branch
      %70 = sbr.rel (0) target = $region25
    $region24: #{tpu_custom_call.1} parent=1 // pred_region
      _
    $region25: #{tpu_custom_call.1} parent=1 // pred_fallthru
      _
    // Predicated region
    $region26: #{tpu_custom_call.1} parent=1 // pred_check
      _
    $region27: #{tpu_custom_call.1} parent=1 // pred_check_branch
      %72 = sbr.rel (0) target = $region29
    $region28: #{tpu_custom_call.1} parent=1 // pred_region
      _
    $region29: #{tpu_custom_call.1} parent=1 // pred_fallthru
      _
    // Predicated region
    $region30: #{tpu_custom_call.1} parent=1 // pred_check
      _
    $region31: #{tpu_custom_call.1} parent=1 // pred_check_branch
      %74 = sbr.rel (0) target = $region33
    $region32: #{tpu_custom_call.1} parent=1 // pred_region
      %76 = dma.done [#allocation4], 2048
    $region33: #{tpu_custom_call.1} parent=1 // pred_fallthru
      _
    // Predicated region
    $region34: #{tpu_custom_call.1} parent=1 // pred_check
      _
    $region35: #{tpu_custom_call.1} parent=1 // pred_check_branch
      %78 = sbr.rel (0) target = $region37
    $region36: #{tpu_custom_call.1} parent=1 // pred_region
      %80 = dma.done [#allocation6], 32768
    $region37: #{tpu_custom_call.1} parent=1 // pred_fallthru
      _
    // Predicated region
    $region38: #{tpu_custom_call.1} parent=1 // pred_check
      _
    $region39: #{tpu_custom_call.1} parent=1 // pred_check_branch
      %82 = sbr.rel (0) target = $region41
    $region40: #{tpu_custom_call.1} parent=1 // pred_region
      %84 = dma.done [#allocation6], 64
    $region41: #{tpu_custom_call.1} parent=1 // pred_fallthru
      _
    // Predicated region
    $region42: #{tpu_custom_call.1} parent=1 // pred_check
      _
    $region43: #{tpu_custom_call.1} parent=1 // pred_check_branch
      %86 = sbr.rel (0) target = $region45
    $region44: #{tpu_custom_call.1} parent=1 // pred_region
      %88 = dma.done [#allocation9], 4096
    $region45: #{tpu_custom_call.1} parent=1 // pred_fallthru
      _
    %v89 = vld [vmem:[#allocation3] sm:$0xff]
    %v90 = vld [vmem:[#allocation3 + $0x8] sm:$0xff]
    %v91 = vld [vmem:[#allocation3 + $0x10] sm:$0xff]
    %v92 = vld [vmem:[#allocation3 + $0x18] sm:$0xff]
    %v93 = vld [vmem:[#allocation3 + $0x20] sm:$0xff]
    %v94 = vld [vmem:[#allocation3 + $0x28] sm:$0xff]
    %v95 = vld [vmem:[#allocation3 + $0x30] sm:$0xff]
    %v96 = vld [vmem:[#allocation3 + $0x38] sm:$0xff]
    %v97 = vld [vmem:[#allocation3 + $0x40] sm:$0xff]
    %v98 = vld [vmem:[#allocation3 + $0x48] sm:$0xff]
    %v99 = vld [vmem:[#allocation3 + $0x50] sm:$0xff]
    %v100 = vld [vmem:[#allocation3 + $0x58] sm:$0xff]
    %v101 = vld [vmem:[#allocation3 + $0x60] sm:$0xff]
    %v102 = vld [vmem:[#allocation3 + $0x68] sm:$0xff]
    %v103 = vld [vmem:[#allocation3 + $0x70] sm:$0xff]
    %v104 = vld [vmem:[#allocation3 + $0x78] sm:$0xff]
    %121 = vst [vmem:[#allocation1] ss:$4 sm:$0xff] %v89
    %s122 = scalar_lea.vmem [#allocation1], 1
    %123 = vst [vmem:[%s122] ss:$4 sm:$0xff] %v91
    %s124 = scalar_lea.vmem [#allocation1], 2
    %125 = vst [vmem:[%s124] ss:$4 sm:$0xff] %v93
    %s126 = scalar_lea.vmem [#allocation1], 3
    %127 = vst [vmem:[%s126] ss:$4 sm:$0xff] %v95
    %s128 = scalar_lea.vmem [#allocation1], 32
    %129 = vst [vmem:[%s128] ss:$4 sm:$0xff] %v90
    %s130 = scalar_lea.vmem [#allocation1], 33
    %131 = vst [vmem:[%s130] ss:$4 sm:$0xff] %v92
    %s132 = scalar_lea.vmem [#allocation1], 34
    %133 = vst [vmem:[%s132] ss:$4 sm:$0xff] %v94
    %s134 = scalar_lea.vmem [#allocation1], 35
    %135 = vst [vmem:[%s134] ss:$4 sm:$0xff] %v96
    %v136 = vld.sshfl [vmem:[#allocation1] sm:$0xff pattern:$0x73625140]
    %v137 = vld.sshfl [vmem:[#allocation1 + $0x8] sm:$0xff pattern:$0x73625140]
    %v138 = vld.sshfl [vmem:[#allocation1 + $0x10] sm:$0xff pattern:$0x73625140]
    %v139 = vld.sshfl [vmem:[#allocation1 + $0x18] sm:$0xff pattern:$0x73625140]
    %v140 = vld.sshfl [vmem:[#allocation1 + $0x20] sm:$0xff pattern:$0x73625140]
    %v141 = vld.sshfl [vmem:[#allocation1 + $0x28] sm:$0xff pattern:$0x73625140]
    %v142 = vld.sshfl [vmem:[#allocation1 + $0x30] sm:$0xff pattern:$0x73625140]
    %v143 = vld.sshfl [vmem:[#allocation1 + $0x38] sm:$0xff pattern:$0x73625140]
    %144 = vst [vmem:[#allocation1] ss:$4 sm:$0xff] %v97
    %145 = vst [vmem:[%s122] ss:$4 sm:$0xff] %v99
    %146 = vst [vmem:[%s124] ss:$4 sm:$0xff] %v101
    %147 = vst [vmem:[%s126] ss:$4 sm:$0xff] %v103
    %148 = vst [vmem:[%s128] ss:$4 sm:$0xff] %v98
    %149 = vst [vmem:[%s130] ss:$4 sm:$0xff] %v100
    %150 = vst [vmem:[%s132] ss:$4 sm:$0xff] %v102
    %151 = vst [vmem:[%s134] ss:$4 sm:$0xff] %v104
    %v152 = vld.sshfl [vmem:[#allocation1] sm:$0xff pattern:$0x73625140]
    %v153 = vld.sshfl [vmem:[#allocation1 + $0x8] sm:$0xff pattern:$0x73625140]
    %v154 = vld.sshfl [vmem:[#allocation1 + $0x10] sm:$0xff pattern:$0x73625140]
    %v155 = vld.sshfl [vmem:[#allocation1 + $0x18] sm:$0xff pattern:$0x73625140]
    %v156 = vld.sshfl [vmem:[#allocation1 + $0x20] sm:$0xff pattern:$0x73625140]
    %v157 = vld.sshfl [vmem:[#allocation1 + $0x28] sm:$0xff pattern:$0x73625140]
    %v158 = vld.sshfl [vmem:[#allocation1 + $0x30] sm:$0xff pattern:$0x73625140]
    %v159 = vld.sshfl [vmem:[#allocation1 + $0x38] sm:$0xff pattern:$0x73625140]
    %v176 = vpack.c.bf16 %v152, %v136
    %v177 = vpack.c.bf16 %v153, %v137
    %v178 = vpack.c.bf16 %v154, %v138
    %v179 = vpack.c.bf16 %v155, %v139
    %v180 = vpack.c.bf16 %v156, %v140
    %v181 = vpack.c.bf16 %v157, %v141
    %v182 = vpack.c.bf16 %v158, %v142
    %v183 = vpack.c.bf16 %v159, %v143
    %v184 = vld [vmem:[#allocation5] sm:$0xff]
    %v185 = vld [vmem:[#allocation5 + $0x8] sm:$0xff]
    %v186 = vld [vmem:[#allocation5 + $0x10] sm:$0xff]
    %v187 = vld [vmem:[#allocation5 + $0x18] sm:$0xff]
    %v188 = vld [vmem:[#allocation5 + $0x20] sm:$0xff]
    %v189 = vld [vmem:[#allocation5 + $0x28] sm:$0xff]
    %v190 = vld [vmem:[#allocation5 + $0x30] sm:$0xff]
    %v191 = vld [vmem:[#allocation5 + $0x38] sm:$0xff]
    %v192 = vld [vmem:[#allocation5 + $0x40] sm:$0xff]
    %v193 = vld [vmem:[#allocation5 + $0x48] sm:$0xff]
    %v194 = vld [vmem:[#allocation5 + $0x50] sm:$0xff]
    %v195 = vld [vmem:[#allocation5 + $0x58] sm:$0xff]
    %v196 = vld [vmem:[#allocation5 + $0x60] sm:$0xff]
    %v197 = vld [vmem:[#allocation5 + $0x68] sm:$0xff]
    %v198 = vld [vmem:[#allocation5 + $0x70] sm:$0xff]
    %v199 = vld [vmem:[#allocation5 + $0x78] sm:$0xff]
    %v200 = vld [vmem:[#allocation5 + $0x80] sm:$0xff]
    %v201 = vld [vmem:[#allocation5 + $0x88] sm:$0xff]
    %v202 = vld [vmem:[#allocation5 + $0x90] sm:$0xff]
    %v203 = vld [vmem:[#allocation5 + $0x98] sm:$0xff]
    %v204 = vld [vmem:[#allocation5 + $0xa0] sm:$0xff]
    %v205 = vld [vmem:[#allocation5 + $0xa8] sm:$0xff]
    %v206 = vld [vmem:[#allocation5 + $0xb0] sm:$0xff]
    %v207 = vld [vmem:[#allocation5 + $0xb8] sm:$0xff]
    %v208 = vld [vmem:[#allocation5 + $0xc0] sm:$0xff]
    %v209 = vld [vmem:[#allocation5 + $0xc8] sm:$0xff]
    %v210 = vld [vmem:[#allocation5 + $0xd0] sm:$0xff]
    %v211 = vld [vmem:[#allocation5 + $0xd8] sm:$0xff]
    %v212 = vld [vmem:[#allocation5 + $0xe0] sm:$0xff]
    %v213 = vld [vmem:[#allocation5 + $0xe8] sm:$0xff]
    %v214 = vld [vmem:[#allocation5 + $0xf0] sm:$0xff]
    %v215 = vld [vmem:[#allocation5 + $0xf8] sm:$0xff]
    %v216 = vld [vmem:[#allocation5 + $0x100] sm:$0xff]
    %v217 = vld [vmem:[#allocation5 + $0x108] sm:$0xff]
    %v218 = vld [vmem:[#allocation5 + $0x110] sm:$0xff]
    %v219 = vld [vmem:[#allocation5 + $0x118] sm:$0xff]
    %v220 = vld [vmem:[#allocation5 + $0x120] sm:$0xff]
    %v221 = vld [vmem:[#allocation5 + $0x128] sm:$0xff]
    %v222 = vld [vmem:[#allocation5 + $0x130] sm:$0xff]
    %v223 = vld [vmem:[#allocation5 + $0x138] sm:$0xff]
    %v224 = vld [vmem:[#allocation5 + $0x140] sm:$0xff]
    %v225 = vld [vmem:[#allocation5 + $0x148] sm:$0xff]
    %v226 = vld [vmem:[#allocation5 + $0x150] sm:$0xff]
    %v227 = vld [vmem:[#allocation5 + $0x158] sm:$0xff]
    %v228 = vld [vmem:[#allocation5 + $0x160] sm:$0xff]
    %v229 = vld [vmem:[#allocation5 + $0x168] sm:$0xff]
    %v230 = vld [vmem:[#allocation5 + $0x170] sm:$0xff]
    %v231 = vld [vmem:[#allocation5 + $0x178] sm:$0xff]
    %v232 = vld [vmem:[#allocation5 + $0x180] sm:$0xff]
    %v233 = vld [vmem:[#allocation5 + $0x188] sm:$0xff]
    %v234 = vld [vmem:[#allocation5 + $0x190] sm:$0xff]
    %v235 = vld [vmem:[#allocation5 + $0x198] sm:$0xff]
    %v236 = vld [vmem:[#allocation5 + $0x1a0] sm:$0xff]
    %v237 = vld [vmem:[#allocation5 + $0x1a8] sm:$0xff]
    %v238 = vld [vmem:[#allocation5 + $0x1b0] sm:$0xff]
    %v239 = vld [vmem:[#allocation5 + $0x1b8] sm:$0xff]
    %v240 = vld [vmem:[#allocation5 + $0x1c0] sm:$0xff]
    %v241 = vld [vmem:[#allocation5 + $0x1c8] sm:$0xff]
    %v242 = vld [vmem:[#allocation5 + $0x1d0] sm:$0xff]
    %v243 = vld [vmem:[#allocation5 + $0x1d8] sm:$0xff]
    %v244 = vld [vmem:[#allocation5 + $0x1e0] sm:$0xff]
    %v245 = vld [vmem:[#allocation5 + $0x1e8] sm:$0xff]
    %v246 = vld [vmem:[#allocation5 + $0x1f0] sm:$0xff]
    %v247 = vld [vmem:[#allocation5 + $0x1f8] sm:$0xff]
    %v248 = vld [vmem:[#allocation5 + $0x200] sm:$0xff]
    %v249 = vld [vmem:[#allocation5 + $0x208] sm:$0xff]
    %v250 = vld [vmem:[#allocation5 + $0x210] sm:$0xff]
    %v251 = vld [vmem:[#allocation5 + $0x218] sm:$0xff]
    %v252 = vld [vmem:[#allocation5 + $0x220] sm:$0xff]
    %v253 = vld [vmem:[#allocation5 + $0x228] sm:$0xff]
    %v254 = vld [vmem:[#allocation5 + $0x230] sm:$0xff]
    %v255 = vld [vmem:[#allocation5 + $0x238] sm:$0xff]
    %v256 = vld [vmem:[#allocation5 + $0x240] sm:$0xff]
    %v257 = vld [vmem:[#allocation5 + $0x248] sm:$0xff]
    %v258 = vld [vmem:[#allocation5 + $0x250] sm:$0xff]
    %v259 = vld [vmem:[#allocation5 + $0x258] sm:$0xff]
    %v260 = vld [vmem:[#allocation5 + $0x260] sm:$0xff]
    %v261 = vld [vmem:[#allocation5 + $0x268] sm:$0xff]
    %v262 = vld [vmem:[#allocation5 + $0x270] sm:$0xff]
    %v263 = vld [vmem:[#allocation5 + $0x278] sm:$0xff]
    %v264 = vld [vmem:[#allocation5 + $0x280] sm:$0xff]
    %v265 = vld [vmem:[#allocation5 + $0x288] sm:$0xff]
    %v266 = vld [vmem:[#allocation5 + $0x290] sm:$0xff]
    %v267 = vld [vmem:[#allocation5 + $0x298] sm:$0xff]
    %v268 = vld [vmem:[#allocation5 + $0x2a0] sm:$0xff]
    %v269 = vld [vmem:[#allocation5 + $0x2a8] sm:$0xff]
    %v270 = vld [vmem:[#allocation5 + $0x2b0] sm:$0xff]
    %v271 = vld [vmem:[#allocation5 + $0x2b8] sm:$0xff]
    %v272 = vld [vmem:[#allocation5 + $0x2c0] sm:$0xff]
    %v273 = vld [vmem:[#allocation5 + $0x2c8] sm:$0xff]
    %v274 = vld [vmem:[#allocation5 + $0x2d0] sm:$0xff]
    %v275 = vld [vmem:[#allocation5 + $0x2d8] sm:$0xff]
    %v276 = vld [vmem:[#allocation5 + $0x2e0] sm:$0xff]
    %v277 = vld [vmem:[#allocation5 + $0x2e8] sm:$0xff]
    %v278 = vld [vmem:[#allocation5 + $0x2f0] sm:$0xff]
    %v279 = vld [vmem:[#allocation5 + $0x2f8] sm:$0xff]
    %v280 = vld [vmem:[#allocation5 + $0x300] sm:$0xff]
    %v281 = vld [vmem:[#allocation5 + $0x308] sm:$0xff]
    %v282 = vld [vmem:[#allocation5 + $0x310] sm:$0xff]
    %v283 = vld [vmem:[#allocation5 + $0x318] sm:$0xff]
    %v284 = vld [vmem:[#allocation5 + $0x320] sm:$0xff]
    %v285 = vld [vmem:[#allocation5 + $0x328] sm:$0xff]
    %v286 = vld [vmem:[#allocation5 + $0x330] sm:$0xff]
    %v287 = vld [vmem:[#allocation5 + $0x338] sm:$0xff]
    %v288 = vld [vmem:[#allocation5 + $0x340] sm:$0xff]
    %v289 = vld [vmem:[#allocation5 + $0x348] sm:$0xff]
    %v290 = vld [vmem:[#allocation5 + $0x350] sm:$0xff]
    %v291 = vld [vmem:[#allocation5 + $0x358] sm:$0xff]
    %v292 = vld [vmem:[#allocation5 + $0x360] sm:$0xff]
    %v293 = vld [vmem:[#allocation5 + $0x368] sm:$0xff]
    %v294 = vld [vmem:[#allocation5 + $0x370] sm:$0xff]
    %v295 = vld [vmem:[#allocation5 + $0x378] sm:$0xff]
    %v296 = vld [vmem:[#allocation5 + $0x380] sm:$0xff]
    %v297 = vld [vmem:[#allocation5 + $0x388] sm:$0xff]
    %v298 = vld [vmem:[#allocation5 + $0x390] sm:$0xff]
    %v299 = vld [vmem:[#allocation5 + $0x398] sm:$0xff]
    %v300 = vld [vmem:[#allocation5 + $0x3a0] sm:$0xff]
    %v301 = vld [vmem:[#allocation5 + $0x3a8] sm:$0xff]
    %v302 = vld [vmem:[#allocation5 + $0x3b0] sm:$0xff]
    %v303 = vld [vmem:[#allocation5 + $0x3b8] sm:$0xff]
    %v304 = vld [vmem:[#allocation5 + $0x3c0] sm:$0xff]
    %v305 = vld [vmem:[#allocation5 + $0x3c8] sm:$0xff]
    %v306 = vld [vmem:[#allocation5 + $0x3d0] sm:$0xff]
    %v307 = vld [vmem:[#allocation5 + $0x3d8] sm:$0xff]
    %v308 = vld [vmem:[#allocation5 + $0x3e0] sm:$0xff]
    %v309 = vld [vmem:[#allocation5 + $0x3e8] sm:$0xff]
    %v310 = vld [vmem:[#allocation5 + $0x3f0] sm:$0xff]
    %v311 = vld [vmem:[#allocation5 + $0x3f8] sm:$0xff]
    %v312 = vld [vmem:[#allocation5 + $0x400] sm:$0xff]
    %v313 = vld [vmem:[#allocation5 + $0x408] sm:$0xff]
    %v314 = vld [vmem:[#allocation5 + $0x410] sm:$0xff]
    %v315 = vld [vmem:[#allocation5 + $0x418] sm:$0xff]
    %v316 = vld [vmem:[#allocation5 + $0x420] sm:$0xff]
    %v317 = vld [vmem:[#allocation5 + $0x428] sm:$0xff]
    %v318 = vld [vmem:[#allocation5 + $0x430] sm:$0xff]
    %v319 = vld [vmem:[#allocation5 + $0x438] sm:$0xff]
    %v320 = vld [vmem:[#allocation5 + $0x440] sm:$0xff]
    %v321 = vld [vmem:[#allocation5 + $0x448] sm:$0xff]
    %v322 = vld [vmem:[#allocation5 + $0x450] sm:$0xff]
    %v323 = vld [vmem:[#allocation5 + $0x458] sm:$0xff]
    %v324 = vld [vmem:[#allocation5 + $0x460] sm:$0xff]
    %v325 = vld [vmem:[#allocation5 + $0x468] sm:$0xff]
    %v326 = vld [vmem:[#allocation5 + $0x470] sm:$0xff]
    %v327 = vld [vmem:[#allocation5 + $0x478] sm:$0xff]
    %v328 = vld [vmem:[#allocation5 + $0x480] sm:$0xff]
    %v329 = vld [vmem:[#allocation5 + $0x488] sm:$0xff]
    %v330 = vld [vmem:[#allocation5 + $0x490] sm:$0xff]
    %v331 = vld [vmem:[#allocation5 + $0x498] sm:$0xff]
    %v332 = vld [vmem:[#allocation5 + $0x4a0] sm:$0xff]
    %v333 = vld [vmem:[#allocation5 + $0x4a8] sm:$0xff]
    %v334 = vld [vmem:[#allocation5 + $0x4b0] sm:$0xff]
    %v335 = vld [vmem:[#allocation5 + $0x4b8] sm:$0xff]
    %v336 = vld [vmem:[#allocation5 + $0x4c0] sm:$0xff]
    %v337 = vld [vmem:[#allocation5 + $0x4c8] sm:$0xff]
    %v338 = vld [vmem:[#allocation5 + $0x4d0] sm:$0xff]
    %v339 = vld [vmem:[#allocation5 + $0x4d8] sm:$0xff]
    %v340 = vld [vmem:[#allocation5 + $0x4e0] sm:$0xff]
    %v341 = vld [vmem:[#allocation5 + $0x4e8] sm:$0xff]
    %v342 = vld [vmem:[#allocation5 + $0x4f0] sm:$0xff]
    %v343 = vld [vmem:[#allocation5 + $0x4f8] sm:$0xff]
    %v344 = vld [vmem:[#allocation5 + $0x500] sm:$0xff]
    %v345 = vld [vmem:[#allocation5 + $0x508] sm:$0xff]
    %v346 = vld [vmem:[#allocation5 + $0x510] sm:$0xff]
    %v347 = vld [vmem:[#allocation5 + $0x518] sm:$0xff]
    %v348 = vld [vmem:[#allocation5 + $0x520] sm:$0xff]
    %v349 = vld [vmem:[#allocation5 + $0x528] sm:$0xff]
    %v350 = vld [vmem:[#allocation5 + $0x530] sm:$0xff]
    %v351 = vld [vmem:[#allocation5 + $0x538] sm:$0xff]
    %v352 = vld [vmem:[#allocation5 + $0x540] sm:$0xff]
    %v353 = vld [vmem:[#allocation5 + $0x548] sm:$0xff]
    %v354 = vld [vmem:[#allocation5 + $0x550] sm:$0xff]
    %v355 = vld [vmem:[#allocation5 + $0x558] sm:$0xff]
    %v356 = vld [vmem:[#allocation5 + $0x560] sm:$0xff]
    %v357 = vld [vmem:[#allocation5 + $0x568] sm:$0xff]
    %v358 = vld [vmem:[#allocation5 + $0x570] sm:$0xff]
    %v359 = vld [vmem:[#allocation5 + $0x578] sm:$0xff]
    %v360 = vld [vmem:[#allocation5 + $0x580] sm:$0xff]
    %v361 = vld [vmem:[#allocation5 + $0x588] sm:$0xff]
    %v362 = vld [vmem:[#allocation5 + $0x590] sm:$0xff]
    %v363 = vld [vmem:[#allocation5 + $0x598] sm:$0xff]
    %v364 = vld [vmem:[#allocation5 + $0x5a0] sm:$0xff]
    %v365 = vld [vmem:[#allocation5 + $0x5a8] sm:$0xff]
    %v366 = vld [vmem:[#allocation5 + $0x5b0] sm:$0xff]
    %v367 = vld [vmem:[#allocation5 + $0x5b8] sm:$0xff]
    %v368 = vld [vmem:[#allocation5 + $0x5c0] sm:$0xff]
    %v369 = vld [vmem:[#allocation5 + $0x5c8] sm:$0xff]
    %v370 = vld [vmem:[#allocation5 + $0x5d0] sm:$0xff]
    %v371 = vld [vmem:[#allocation5 + $0x5d8] sm:$0xff]
    %v372 = vld [vmem:[#allocation5 + $0x5e0] sm:$0xff]
    %v373 = vld [vmem:[#allocation5 + $0x5e8] sm:$0xff]
    %v374 = vld [vmem:[#allocation5 + $0x5f0] sm:$0xff]
    %v375 = vld [vmem:[#allocation5 + $0x5f8] sm:$0xff]
    %v376 = vld [vmem:[#allocation5 + $0x600] sm:$0xff]
    %v377 = vld [vmem:[#allocation5 + $0x608] sm:$0xff]
    %v378 = vld [vmem:[#allocation5 + $0x610] sm:$0xff]
    %v379 = vld [vmem:[#allocation5 + $0x618] sm:$0xff]
    %v380 = vld [vmem:[#allocation5 + $0x620] sm:$0xff]
    %v381 = vld [vmem:[#allocation5 + $0x628] sm:$0xff]
    %v382 = vld [vmem:[#allocation5 + $0x630] sm:$0xff]
    %v383 = vld [vmem:[#allocation5 + $0x638] sm:$0xff]
    %v384 = vld [vmem:[#allocation5 + $0x640] sm:$0xff]
    %v385 = vld [vmem:[#allocation5 + $0x648] sm:$0xff]
    %v386 = vld [vmem:[#allocation5 + $0x650] sm:$0xff]
    %v387 = vld [vmem:[#allocation5 + $0x658] sm:$0xff]
    %v388 = vld [vmem:[#allocation5 + $0x660] sm:$0xff]
    %v389 = vld [vmem:[#allocation5 + $0x668] sm:$0xff]
    %v390 = vld [vmem:[#allocation5 + $0x670] sm:$0xff]
    %v391 = vld [vmem:[#allocation5 + $0x678] sm:$0xff]
    %v392 = vld [vmem:[#allocation5 + $0x680] sm:$0xff]
    %v393 = vld [vmem:[#allocation5 + $0x688] sm:$0xff]
    %v394 = vld [vmem:[#allocation5 + $0x690] sm:$0xff]
    %v395 = vld [vmem:[#allocation5 + $0x698] sm:$0xff]
    %v396 = vld [vmem:[#allocation5 + $0x6a0] sm:$0xff]
    %v397 = vld [vmem:[#allocation5 + $0x6a8] sm:$0xff]
    %v398 = vld [vmem:[#allocation5 + $0x6b0] sm:$0xff]
    %v399 = vld [vmem:[#allocation5 + $0x6b8] sm:$0xff]
    %v400 = vld [vmem:[#allocation5 + $0x6c0] sm:$0xff]
    %v401 = vld [vmem:[#allocation5 + $0x6c8] sm:$0xff]
    %v402 = vld [vmem:[#allocation5 + $0x6d0] sm:$0xff]
    %v403 = vld [vmem:[#allocation5 + $0x6d8] sm:$0xff]
    %v404 = vld [vmem:[#allocation5 + $0x6e0] sm:$0xff]
    %v405 = vld [vmem:[#allocation5 + $0x6e8] sm:$0xff]
    %v406 = vld [vmem:[#allocation5 + $0x6f0] sm:$0xff]
    %v407 = vld [vmem:[#allocation5 + $0x6f8] sm:$0xff]
    %v408 = vld [vmem:[#allocation5 + $0x700] sm:$0xff]
    %v409 = vld [vmem:[#allocation5 + $0x708] sm:$0xff]
    %v410 = vld [vmem:[#allocation5 + $0x710] sm:$0xff]
    %v411 = vld [vmem:[#allocation5 + $0x718] sm:$0xff]
    %v412 = vld [vmem:[#allocation5 + $0x720] sm:$0xff]
    %v413 = vld [vmem:[#allocation5 + $0x728] sm:$0xff]
    %v414 = vld [vmem:[#allocation5 + $0x730] sm:$0xff]
    %v415 = vld [vmem:[#allocation5 + $0x738] sm:$0xff]
    %v416 = vld [vmem:[#allocation5 + $0x740] sm:$0xff]
    %v417 = vld [vmem:[#allocation5 + $0x748] sm:$0xff]
    %v418 = vld [vmem:[#allocation5 + $0x750] sm:$0xff]
    %v419 = vld [vmem:[#allocation5 + $0x758] sm:$0xff]
    %v420 = vld [vmem:[#allocation5 + $0x760] sm:$0xff]
    %v421 = vld [vmem:[#allocation5 + $0x768] sm:$0xff]
    %v422 = vld [vmem:[#allocation5 + $0x770] sm:$0xff]
    %v423 = vld [vmem:[#allocation5 + $0x778] sm:$0xff]
    %v424 = vld [vmem:[#allocation5 + $0x780] sm:$0xff]
    %v425 = vld [vmem:[#allocation5 + $0x788] sm:$0xff]
    %v426 = vld [vmem:[#allocation5 + $0x790] sm:$0xff]
    %v427 = vld [vmem:[#allocation5 + $0x798] sm:$0xff]
    %v428 = vld [vmem:[#allocation5 + $0x7a0] sm:$0xff]
    %v429 = vld [vmem:[#allocation5 + $0x7a8] sm:$0xff]
    %v430 = vld [vmem:[#allocation5 + $0x7b0] sm:$0xff]
    %v431 = vld [vmem:[#allocation5 + $0x7b8] sm:$0xff]
    %v432 = vld [vmem:[#allocation5 + $0x7c0] sm:$0xff]
    %v433 = vld [vmem:[#allocation5 + $0x7c8] sm:$0xff]
    %v434 = vld [vmem:[#allocation5 + $0x7d0] sm:$0xff]
    %v435 = vld [vmem:[#allocation5 + $0x7d8] sm:$0xff]
    %v436 = vld [vmem:[#allocation5 + $0x7e0] sm:$0xff]
    %v437 = vld [vmem:[#allocation5 + $0x7e8] sm:$0xff]
    %v438 = vld [vmem:[#allocation5 + $0x7f0] sm:$0xff]
    %v439 = vld [vmem:[#allocation5 + $0x7f8] sm:$0xff]
    %v440 = vld [vmem:[#allocation7] sm:$0xf]
    %v442 = vperm.slane %v440, 0
    %v443 = vperm.slane %v440, 1
    %v444 = vperm.slane %v440, 2
    %v445 = vperm.slane %v440, 3
    %v706 = vunpack.c.l.b16 %v184
    %v707 = vunpack.c.h.b16 %v184
    %v708 = vunpack.c.l.b16 %v185
    %v709 = vunpack.c.h.b16 %v185
    %v710 = vunpack.c.l.b16 %v186
    %v711 = vunpack.c.h.b16 %v186
    %v712 = vunpack.c.l.b16 %v187
    %v713 = vunpack.c.h.b16 %v187
    %v714 = vunpack.c.l.b16 %v188
    %v715 = vunpack.c.h.b16 %v188
    %v716 = vunpack.c.l.b16 %v189
    %v717 = vunpack.c.h.b16 %v189
    %v718 = vunpack.c.l.b16 %v190
    %v719 = vunpack.c.h.b16 %v190
    %v720 = vunpack.c.l.b16 %v191
    %v721 = vunpack.c.h.b16 %v191
    %v722 = vunpack.c.l.b16 %v192
    %v723 = vunpack.c.h.b16 %v192
    %v724 = vunpack.c.l.b16 %v193
    %v725 = vunpack.c.h.b16 %v193
    %v726 = vunpack.c.l.b16 %v194
    %v727 = vunpack.c.h.b16 %v194
    %v728 = vunpack.c.l.b16 %v195
    %v729 = vunpack.c.h.b16 %v195
    %v730 = vunpack.c.l.b16 %v196
    %v731 = vunpack.c.h.b16 %v196
    %v732 = vunpack.c.l.b16 %v197
    %v733 = vunpack.c.h.b16 %v197
    %v734 = vunpack.c.l.b16 %v198
    %v735 = vunpack.c.h.b16 %v198
    %v736 = vunpack.c.l.b16 %v199
    %v737 = vunpack.c.h.b16 %v199
    %v738 = vunpack.c.l.b16 %v200
    %v739 = vunpack.c.h.b16 %v200
    %v740 = vunpack.c.l.b16 %v201
    %v741 = vunpack.c.h.b16 %v201
    %v742 = vunpack.c.l.b16 %v202
    %v743 = vunpack.c.h.b16 %v202
    %v744 = vunpack.c.l.b16 %v203
    %v745 = vunpack.c.h.b16 %v203
    %v746 = vunpack.c.l.b16 %v204
    %v747 = vunpack.c.h.b16 %v204
    %v748 = vunpack.c.l.b16 %v205
    %v749 = vunpack.c.h.b16 %v205
    %v750 = vunpack.c.l.b16 %v206
    %v751 = vunpack.c.h.b16 %v206
    %v752 = vunpack.c.l.b16 %v207
    %v753 = vunpack.c.h.b16 %v207
    %v754 = vunpack.c.l.b16 %v208
    %v755 = vunpack.c.h.b16 %v208
    %v756 = vunpack.c.l.b16 %v209
    %v757 = vunpack.c.h.b16 %v209
    %v758 = vunpack.c.l.b16 %v210
    %v759 = vunpack.c.h.b16 %v210
    %v760 = vunpack.c.l.b16 %v211
    %v761 = vunpack.c.h.b16 %v211
    %v762 = vunpack.c.l.b16 %v212
    %v763 = vunpack.c.h.b16 %v212
    %v764 = vunpack.c.l.b16 %v213
    %v765 = vunpack.c.h.b16 %v213
    %v766 = vunpack.c.l.b16 %v214
    %v767 = vunpack.c.h.b16 %v214
    %v768 = vunpack.c.l.b16 %v215
    %v769 = vunpack.c.h.b16 %v215
    %v770 = vunpack.c.l.b16 %v216
    %v771 = vunpack.c.h.b16 %v216
    %v772 = vunpack.c.l.b16 %v217
    %v773 = vunpack.c.h.b16 %v217
    %v774 = vunpack.c.l.b16 %v218
    %v775 = vunpack.c.h.b16 %v218
    %v776 = vunpack.c.l.b16 %v219
    %v777 = vunpack.c.h.b16 %v219
    %v778 = vunpack.c.l.b16 %v220
    %v779 = vunpack.c.h.b16 %v220
    %v780 = vunpack.c.l.b16 %v221
    %v781 = vunpack.c.h.b16 %v221
    %v782 = vunpack.c.l.b16 %v222
    %v783 = vunpack.c.h.b16 %v222
    %v784 = vunpack.c.l.b16 %v223
    %v785 = vunpack.c.h.b16 %v223
    %v786 = vunpack.c.l.b16 %v224
    %v787 = vunpack.c.h.b16 %v224
    %v788 = vunpack.c.l.b16 %v225
    %v789 = vunpack.c.h.b16 %v225
    %v790 = vunpack.c.l.b16 %v226
    %v791 = vunpack.c.h.b16 %v226
    %v792 = vunpack.c.l.b16 %v227
    %v793 = vunpack.c.h.b16 %v227
    %v794 = vunpack.c.l.b16 %v228
    %v795 = vunpack.c.h.b16 %v228
    %v796 = vunpack.c.l.b16 %v229
    %v797 = vunpack.c.h.b16 %v229
    %v798 = vunpack.c.l.b16 %v230
    %v799 = vunpack.c.h.b16 %v230
    %v800 = vunpack.c.l.b16 %v231
    %v801 = vunpack.c.h.b16 %v231
    %v802 = vunpack.c.l.b16 %v232
    %v803 = vunpack.c.h.b16 %v232
    %v804 = vunpack.c.l.b16 %v233
    %v805 = vunpack.c.h.b16 %v233
    %v806 = vunpack.c.l.b16 %v234
    %v807 = vunpack.c.h.b16 %v234
    %v808 = vunpack.c.l.b16 %v235
    %v809 = vunpack.c.h.b16 %v235
    %v810 = vunpack.c.l.b16 %v236
    %v811 = vunpack.c.h.b16 %v236
    %v812 = vunpack.c.l.b16 %v237
    %v813 = vunpack.c.h.b16 %v237
    %v814 = vunpack.c.l.b16 %v238
    %v815 = vunpack.c.h.b16 %v238
    %v816 = vunpack.c.l.b16 %v239
    %v817 = vunpack.c.h.b16 %v239
    %v818 = vunpack.c.l.b16 %v240
    %v819 = vunpack.c.h.b16 %v240
    %v820 = vunpack.c.l.b16 %v241
    %v821 = vunpack.c.h.b16 %v241
    %v822 = vunpack.c.l.b16 %v242
    %v823 = vunpack.c.h.b16 %v242
    %v824 = vunpack.c.l.b16 %v243
    %v825 = vunpack.c.h.b16 %v243
    %v826 = vunpack.c.l.b16 %v244
    %v827 = vunpack.c.h.b16 %v244
    %v828 = vunpack.c.l.b16 %v245
    %v829 = vunpack.c.h.b16 %v245
    %v830 = vunpack.c.l.b16 %v246
    %v831 = vunpack.c.h.b16 %v246
    %v832 = vunpack.c.l.b16 %v247
    %v833 = vunpack.c.h.b16 %v247
    %v834 = vunpack.c.l.b16 %v248
    %v835 = vunpack.c.h.b16 %v248
    %v836 = vunpack.c.l.b16 %v249
    %v837 = vunpack.c.h.b16 %v249
    %v838 = vunpack.c.l.b16 %v250
    %v839 = vunpack.c.h.b16 %v250
    %v840 = vunpack.c.l.b16 %v251
    %v841 = vunpack.c.h.b16 %v251
    %v842 = vunpack.c.l.b16 %v252
    %v843 = vunpack.c.h.b16 %v252
    %v844 = vunpack.c.l.b16 %v253
    %v845 = vunpack.c.h.b16 %v253
    %v846 = vunpack.c.l.b16 %v254
    %v847 = vunpack.c.h.b16 %v254
    %v848 = vunpack.c.l.b16 %v255
    %v849 = vunpack.c.h.b16 %v255
    %v850 = vunpack.c.l.b16 %v256
    %v851 = vunpack.c.h.b16 %v256
    %v852 = vunpack.c.l.b16 %v257
    %v853 = vunpack.c.h.b16 %v257
    %v854 = vunpack.c.l.b16 %v258
    %v855 = vunpack.c.h.b16 %v258
    %v856 = vunpack.c.l.b16 %v259
    %v857 = vunpack.c.h.b16 %v259
    %v858 = vunpack.c.l.b16 %v260
    %v859 = vunpack.c.h.b16 %v260
    %v860 = vunpack.c.l.b16 %v261
    %v861 = vunpack.c.h.b16 %v261
    %v862 = vunpack.c.l.b16 %v262
    %v863 = vunpack.c.h.b16 %v262
    %v864 = vunpack.c.l.b16 %v263
    %v865 = vunpack.c.h.b16 %v263
    %v866 = vunpack.c.l.b16 %v264
    %v867 = vunpack.c.h.b16 %v264
    %v868 = vunpack.c.l.b16 %v265
    %v869 = vunpack.c.h.b16 %v265
    %v870 = vunpack.c.l.b16 %v266
    %v871 = vunpack.c.h.b16 %v266
    %v872 = vunpack.c.l.b16 %v267
    %v873 = vunpack.c.h.b16 %v267
    %v874 = vunpack.c.l.b16 %v268
    %v875 = vunpack.c.h.b16 %v268
    %v876 = vunpack.c.l.b16 %v269
    %v877 = vunpack.c.h.b16 %v269
    %v878 = vunpack.c.l.b16 %v270
    %v879 = vunpack.c.h.b16 %v270
    %v880 = vunpack.c.l.b16 %v271
    %v881 = vunpack.c.h.b16 %v271
    %v882 = vunpack.c.l.b16 %v272
    %v883 = vunpack.c.h.b16 %v272
    %v884 = vunpack.c.l.b16 %v273
    %v885 = vunpack.c.h.b16 %v273
    %v886 = vunpack.c.l.b16 %v274
    %v887 = vunpack.c.h.b16 %v274
    %v888 = vunpack.c.l.b16 %v275
    %v889 = vunpack.c.h.b16 %v275
    %v890 = vunpack.c.l.b16 %v276
    %v891 = vunpack.c.h.b16 %v276
    %v892 = vunpack.c.l.b16 %v277
    %v893 = vunpack.c.h.b16 %v277
    %v894 = vunpack.c.l.b16 %v278
    %v895 = vunpack.c.h.b16 %v278
    %v896 = vunpack.c.l.b16 %v279
    %v897 = vunpack.c.h.b16 %v279
    %v898 = vunpack.c.l.b16 %v280
    %v899 = vunpack.c.h.b16 %v280
    %v900 = vunpack.c.l.b16 %v281
    %v901 = vunpack.c.h.b16 %v281
    %v902 = vunpack.c.l.b16 %v282
    %v903 = vunpack.c.h.b16 %v282
    %v904 = vunpack.c.l.b16 %v283
    %v905 = vunpack.c.h.b16 %v283
    %v906 = vunpack.c.l.b16 %v284
    %v907 = vunpack.c.h.b16 %v284
    %v908 = vunpack.c.l.b16 %v285
    %v909 = vunpack.c.h.b16 %v285
    %v910 = vunpack.c.l.b16 %v286
    %v911 = vunpack.c.h.b16 %v286
    %v912 = vunpack.c.l.b16 %v287
    %v913 = vunpack.c.h.b16 %v287
    %v914 = vunpack.c.l.b16 %v288
    %v915 = vunpack.c.h.b16 %v288
    %v916 = vunpack.c.l.b16 %v289
    %v917 = vunpack.c.h.b16 %v289
    %v918 = vunpack.c.l.b16 %v290
    %v919 = vunpack.c.h.b16 %v290
    %v920 = vunpack.c.l.b16 %v291
    %v921 = vunpack.c.h.b16 %v291
    %v922 = vunpack.c.l.b16 %v292
    %v923 = vunpack.c.h.b16 %v292
    %v924 = vunpack.c.l.b16 %v293
    %v925 = vunpack.c.h.b16 %v293
    %v926 = vunpack.c.l.b16 %v294
    %v927 = vunpack.c.h.b16 %v294
    %v928 = vunpack.c.l.b16 %v295
    %v929 = vunpack.c.h.b16 %v295
    %v930 = vunpack.c.l.b16 %v296
    %v931 = vunpack.c.h.b16 %v296
    %v932 = vunpack.c.l.b16 %v297
    %v933 = vunpack.c.h.b16 %v297
    %v934 = vunpack.c.l.b16 %v298
    %v935 = vunpack.c.h.b16 %v298
    %v936 = vunpack.c.l.b16 %v299
    %v937 = vunpack.c.h.b16 %v299
    %v938 = vunpack.c.l.b16 %v300
    %v939 = vunpack.c.h.b16 %v300
    %v940 = vunpack.c.l.b16 %v301
    %v941 = vunpack.c.h.b16 %v301
    %v942 = vunpack.c.l.b16 %v302
    %v943 = vunpack.c.h.b16 %v302
    %v944 = vunpack.c.l.b16 %v303
    %v945 = vunpack.c.h.b16 %v303
    %v946 = vunpack.c.l.b16 %v304
    %v947 = vunpack.c.h.b16 %v304
    %v948 = vunpack.c.l.b16 %v305
    %v949 = vunpack.c.h.b16 %v305
    %v950 = vunpack.c.l.b16 %v306
    %v951 = vunpack.c.h.b16 %v306
    %v952 = vunpack.c.l.b16 %v307
    %v953 = vunpack.c.h.b16 %v307
    %v954 = vunpack.c.l.b16 %v308
    %v955 = vunpack.c.h.b16 %v308
    %v956 = vunpack.c.l.b16 %v309
    %v957 = vunpack.c.h.b16 %v309
    %v958 = vunpack.c.l.b16 %v310
    %v959 = vunpack.c.h.b16 %v310
    %v960 = vunpack.c.l.b16 %v311
    %v961 = vunpack.c.h.b16 %v311
    %v962 = vunpack.c.l.b16 %v312
    %v963 = vunpack.c.h.b16 %v312
    %v964 = vunpack.c.l.b16 %v313
    %v965 = vunpack.c.h.b16 %v313
    %v966 = vunpack.c.l.b16 %v314
    %v967 = vunpack.c.h.b16 %v314
    %v968 = vunpack.c.l.b16 %v315
    %v969 = vunpack.c.h.b16 %v315
    %v970 = vunpack.c.l.b16 %v316
    %v971 = vunpack.c.h.b16 %v316
    %v972 = vunpack.c.l.b16 %v317
    %v973 = vunpack.c.h.b16 %v317
    %v974 = vunpack.c.l.b16 %v318
    %v975 = vunpack.c.h.b16 %v318
    %v976 = vunpack.c.l.b16 %v319
    %v977 = vunpack.c.h.b16 %v319
    %v978 = vunpack.c.l.b16 %v320
    %v979 = vunpack.c.h.b16 %v320
    %v980 = vunpack.c.l.b16 %v321
    %v981 = vunpack.c.h.b16 %v321
    %v982 = vunpack.c.l.b16 %v322
    %v983 = vunpack.c.h.b16 %v322
    %v984 = vunpack.c.l.b16 %v323
    %v985 = vunpack.c.h.b16 %v323
    %v986 = vunpack.c.l.b16 %v324
    %v987 = vunpack.c.h.b16 %v324
    %v988 = vunpack.c.l.b16 %v325
    %v989 = vunpack.c.h.b16 %v325
    %v990 = vunpack.c.l.b16 %v326
    %v991 = vunpack.c.h.b16 %v326
    %v992 = vunpack.c.l.b16 %v327
    %v993 = vunpack.c.h.b16 %v327
    %v994 = vunpack.c.l.b16 %v328
    %v995 = vunpack.c.h.b16 %v328
    %v996 = vunpack.c.l.b16 %v329
    %v997 = vunpack.c.h.b16 %v329
    %v998 = vunpack.c.l.b16 %v330
    %v999 = vunpack.c.h.b16 %v330
    %v1000 = vunpack.c.l.b16 %v331
    %v1001 = vunpack.c.h.b16 %v331
    %v1002 = vunpack.c.l.b16 %v332
    %v1003 = vunpack.c.h.b16 %v332
    %v1004 = vunpack.c.l.b16 %v333
    %v1005 = vunpack.c.h.b16 %v333
    %v1006 = vunpack.c.l.b16 %v334
    %v1007 = vunpack.c.h.b16 %v334
    %v1008 = vunpack.c.l.b16 %v335
    %v1009 = vunpack.c.h.b16 %v335
    %v1010 = vunpack.c.l.b16 %v336
    %v1011 = vunpack.c.h.b16 %v336
    %v1012 = vunpack.c.l.b16 %v337
    %v1013 = vunpack.c.h.b16 %v337
    %v1014 = vunpack.c.l.b16 %v338
    %v1015 = vunpack.c.h.b16 %v338
    %v1016 = vunpack.c.l.b16 %v339
    %v1017 = vunpack.c.h.b16 %v339
    %v1018 = vunpack.c.l.b16 %v340
    %v1019 = vunpack.c.h.b16 %v340
    %v1020 = vunpack.c.l.b16 %v341
    %v1021 = vunpack.c.h.b16 %v341
    %v1022 = vunpack.c.l.b16 %v342
    %v1023 = vunpack.c.h.b16 %v342
    %v1024 = vunpack.c.l.b16 %v343
    %v1025 = vunpack.c.h.b16 %v343
    %v1026 = vunpack.c.l.b16 %v344
    %v1027 = vunpack.c.h.b16 %v344
    %v1028 = vunpack.c.l.b16 %v345
    %v1029 = vunpack.c.h.b16 %v345
    %v1030 = vunpack.c.l.b16 %v346
    %v1031 = vunpack.c.h.b16 %v346
    %v1032 = vunpack.c.l.b16 %v347
    %v1033 = vunpack.c.h.b16 %v347
    %v1034 = vunpack.c.l.b16 %v348
    %v1035 = vunpack.c.h.b16 %v348
    %v1036 = vunpack.c.l.b16 %v349
    %v1037 = vunpack.c.h.b16 %v349
    %v1038 = vunpack.c.l.b16 %v350
    %v1039 = vunpack.c.h.b16 %v350
    %v1040 = vunpack.c.l.b16 %v351
    %v1041 = vunpack.c.h.b16 %v351
    %v1042 = vunpack.c.l.b16 %v352
    %v1043 = vunpack.c.h.b16 %v352
    %v1044 = vunpack.c.l.b16 %v353
    %v1045 = vunpack.c.h.b16 %v353
    %v1046 = vunpack.c.l.b16 %v354
    %v1047 = vunpack.c.h.b16 %v354
    %v1048 = vunpack.c.l.b16 %v355
    %v1049 = vunpack.c.h.b16 %v355
    %v1050 = vunpack.c.l.b16 %v356
    %v1051 = vunpack.c.h.b16 %v356
    %v1052 = vunpack.c.l.b16 %v357
    %v1053 = vunpack.c.h.b16 %v357
    %v1054 = vunpack.c.l.b16 %v358
    %v1055 = vunpack.c.h.b16 %v358
    %v1056 = vunpack.c.l.b16 %v359
    %v1057 = vunpack.c.h.b16 %v359
    %v1058 = vunpack.c.l.b16 %v360
    %v1059 = vunpack.c.h.b16 %v360
    %v1060 = vunpack.c.l.b16 %v361
    %v1061 = vunpack.c.h.b16 %v361
    %v1062 = vunpack.c.l.b16 %v362
    %v1063 = vunpack.c.h.b16 %v362
    %v1064 = vunpack.c.l.b16 %v363
    %v1065 = vunpack.c.h.b16 %v363
    %v1066 = vunpack.c.l.b16 %v364
    %v1067 = vunpack.c.h.b16 %v364
    %v1068 = vunpack.c.l.b16 %v365
    %v1069 = vunpack.c.h.b16 %v365
    %v1070 = vunpack.c.l.b16 %v366
    %v1071 = vunpack.c.h.b16 %v366
    %v1072 = vunpack.c.l.b16 %v367
    %v1073 = vunpack.c.h.b16 %v367
    %v1074 = vunpack.c.l.b16 %v368
    %v1075 = vunpack.c.h.b16 %v368
    %v1076 = vunpack.c.l.b16 %v369
    %v1077 = vunpack.c.h.b16 %v369
    %v1078 = vunpack.c.l.b16 %v370
    %v1079 = vunpack.c.h.b16 %v370
    %v1080 = vunpack.c.l.b16 %v371
    %v1081 = vunpack.c.h.b16 %v371
    %v1082 = vunpack.c.l.b16 %v372
    %v1083 = vunpack.c.h.b16 %v372
    %v1084 = vunpack.c.l.b16 %v373
    %v1085 = vunpack.c.h.b16 %v373
    %v1086 = vunpack.c.l.b16 %v374
    %v1087 = vunpack.c.h.b16 %v374
    %v1088 = vunpack.c.l.b16 %v375
    %v1089 = vunpack.c.h.b16 %v375
    %v1090 = vunpack.c.l.b16 %v376
    %v1091 = vunpack.c.h.b16 %v376
    %v1092 = vunpack.c.l.b16 %v377
    %v1093 = vunpack.c.h.b16 %v377
    %v1094 = vunpack.c.l.b16 %v378
    %v1095 = vunpack.c.h.b16 %v378
    %v1096 = vunpack.c.l.b16 %v379
    %v1097 = vunpack.c.h.b16 %v379
    %v1098 = vunpack.c.l.b16 %v380
    %v1099 = vunpack.c.h.b16 %v380
    %v1100 = vunpack.c.l.b16 %v381
    %v1101 = vunpack.c.h.b16 %v381
    %v1102 = vunpack.c.l.b16 %v382
    %v1103 = vunpack.c.h.b16 %v382
    %v1104 = vunpack.c.l.b16 %v383
    %v1105 = vunpack.c.h.b16 %v383
    %v1106 = vunpack.c.l.b16 %v384
    %v1107 = vunpack.c.h.b16 %v384
    %v1108 = vunpack.c.l.b16 %v385
    %v1109 = vunpack.c.h.b16 %v385
    %v1110 = vunpack.c.l.b16 %v386
    %v1111 = vunpack.c.h.b16 %v386
    %v1112 = vunpack.c.l.b16 %v387
    %v1113 = vunpack.c.h.b16 %v387
    %v1114 = vunpack.c.l.b16 %v388
    %v1115 = vunpack.c.h.b16 %v388
    %v1116 = vunpack.c.l.b16 %v389
    %v1117 = vunpack.c.h.b16 %v389
    %v1118 = vunpack.c.l.b16 %v390
    %v1119 = vunpack.c.h.b16 %v390
    %v1120 = vunpack.c.l.b16 %v391
    %v1121 = vunpack.c.h.b16 %v391
    %v1122 = vunpack.c.l.b16 %v392
    %v1123 = vunpack.c.h.b16 %v392
    %v1124 = vunpack.c.l.b16 %v393
    %v1125 = vunpack.c.h.b16 %v393
    %v1126 = vunpack.c.l.b16 %v394
    %v1127 = vunpack.c.h.b16 %v394
    %v1128 = vunpack.c.l.b16 %v395
    %v1129 = vunpack.c.h.b16 %v395
    %v1130 = vunpack.c.l.b16 %v396
    %v1131 = vunpack.c.h.b16 %v396
    %v1132 = vunpack.c.l.b16 %v397
    %v1133 = vunpack.c.h.b16 %v397
    %v1134 = vunpack.c.l.b16 %v398
    %v1135 = vunpack.c.h.b16 %v398
    %v1136 = vunpack.c.l.b16 %v399
    %v1137 = vunpack.c.h.b16 %v399
    %v1138 = vunpack.c.l.b16 %v400
    %v1139 = vunpack.c.h.b16 %v400
    %v1140 = vunpack.c.l.b16 %v401
    %v1141 = vunpack.c.h.b16 %v401
    %v1142 = vunpack.c.l.b16 %v402
    %v1143 = vunpack.c.h.b16 %v402
    %v1144 = vunpack.c.l.b16 %v403
    %v1145 = vunpack.c.h.b16 %v403
    %v1146 = vunpack.c.l.b16 %v404
    %v1147 = vunpack.c.h.b16 %v404
    %v1148 = vunpack.c.l.b16 %v405
    %v1149 = vunpack.c.h.b16 %v405
    %v1150 = vunpack.c.l.b16 %v406
    %v1151 = vunpack.c.h.b16 %v406
    %v1152 = vunpack.c.l.b16 %v407
    %v1153 = vunpack.c.h.b16 %v407
    %v1154 = vunpack.c.l.b16 %v408
    %v1155 = vunpack.c.h.b16 %v408
    %v1156 = vunpack.c.l.b16 %v409
    %v1157 = vunpack.c.h.b16 %v409
    %v1158 = vunpack.c.l.b16 %v410
    %v1159 = vunpack.c.h.b16 %v410
    %v1160 = vunpack.c.l.b16 %v411
    %v1161 = vunpack.c.h.b16 %v411
    %v1162 = vunpack.c.l.b16 %v412
    %v1163 = vunpack.c.h.b16 %v412
    %v1164 = vunpack.c.l.b16 %v413
    %v1165 = vunpack.c.h.b16 %v413
    %v1166 = vunpack.c.l.b16 %v414
    %v1167 = vunpack.c.h.b16 %v414
    %v1168 = vunpack.c.l.b16 %v415
    %v1169 = vunpack.c.h.b16 %v415
    %v1170 = vunpack.c.l.b16 %v416
    %v1171 = vunpack.c.h.b16 %v416
    %v1172 = vunpack.c.l.b16 %v417
    %v1173 = vunpack.c.h.b16 %v417
    %v1174 = vunpack.c.l.b16 %v418
    %v1175 = vunpack.c.h.b16 %v418
    %v1176 = vunpack.c.l.b16 %v419
    %v1177 = vunpack.c.h.b16 %v419
    %v1178 = vunpack.c.l.b16 %v420
    %v1179 = vunpack.c.h.b16 %v420
    %v1180 = vunpack.c.l.b16 %v421
    %v1181 = vunpack.c.h.b16 %v421
    %v1182 = vunpack.c.l.b16 %v422
    %v1183 = vunpack.c.h.b16 %v422
    %v1184 = vunpack.c.l.b16 %v423
    %v1185 = vunpack.c.h.b16 %v423
    %v1186 = vunpack.c.l.b16 %v424
    %v1187 = vunpack.c.h.b16 %v424
    %v1188 = vunpack.c.l.b16 %v425
    %v1189 = vunpack.c.h.b16 %v425
    %v1190 = vunpack.c.l.b16 %v426
    %v1191 = vunpack.c.h.b16 %v426
    %v1192 = vunpack.c.l.b16 %v427
    %v1193 = vunpack.c.h.b16 %v427
    %v1194 = vunpack.c.l.b16 %v428
    %v1195 = vunpack.c.h.b16 %v428
    %v1196 = vunpack.c.l.b16 %v429
    %v1197 = vunpack.c.h.b16 %v429
    %v1198 = vunpack.c.l.b16 %v430
    %v1199 = vunpack.c.h.b16 %v430
    %v1200 = vunpack.c.l.b16 %v431
    %v1201 = vunpack.c.h.b16 %v431
    %v1202 = vunpack.c.l.b16 %v432
    %v1203 = vunpack.c.h.b16 %v432
    %v1204 = vunpack.c.l.b16 %v433
    %v1205 = vunpack.c.h.b16 %v433
    %v1206 = vunpack.c.l.b16 %v434
    %v1207 = vunpack.c.h.b16 %v434
    %v1208 = vunpack.c.l.b16 %v435
    %v1209 = vunpack.c.h.b16 %v435
    %v1210 = vunpack.c.l.b16 %v436
    %v1211 = vunpack.c.h.b16 %v436
    %v1212 = vunpack.c.l.b16 %v437
    %v1213 = vunpack.c.h.b16 %v437
    %v1214 = vunpack.c.l.b16 %v438
    %v1215 = vunpack.c.h.b16 %v438
    %v1216 = vunpack.c.l.b16 %v439
    %v1217 = vunpack.c.h.b16 %v439
    %v1218 = vpack.c.b16 %v710, %v706
    %v1219 = vpack.c.b16 %v711, %v707
    %v1220 = vpack.c.b16 %v712, %v708
    %v1221 = vpack.c.b16 %v713, %v709
    %v1222 = vpack.c.b16 %v718, %v714
    %v1223 = vpack.c.b16 %v719, %v715
    %v1224 = vpack.c.b16 %v720, %v716
    %v1225 = vpack.c.b16 %v721, %v717
    %v1226 = vpack.c.b16 %v726, %v722
    %v1227 = vpack.c.b16 %v727, %v723
    %v1228 = vpack.c.b16 %v728, %v724
    %v1229 = vpack.c.b16 %v729, %v725
    %v1230 = vpack.c.b16 %v734, %v730
    %v1231 = vpack.c.b16 %v735, %v731
    %v1232 = vpack.c.b16 %v736, %v732
    %v1233 = vpack.c.b16 %v737, %v733
    %v1234 = vpack.c.b16 %v742, %v738
    %v1235 = vpack.c.b16 %v743, %v739
    %v1236 = vpack.c.b16 %v744, %v740
    %v1237 = vpack.c.b16 %v745, %v741
    %v1238 = vpack.c.b16 %v750, %v746
    %v1239 = vpack.c.b16 %v751, %v747
    %v1240 = vpack.c.b16 %v752, %v748
    %v1241 = vpack.c.b16 %v753, %v749
    %v1242 = vpack.c.b16 %v758, %v754
    %v1243 = vpack.c.b16 %v759, %v755
    %v1244 = vpack.c.b16 %v760, %v756
    %v1245 = vpack.c.b16 %v761, %v757
    %v1246 = vpack.c.b16 %v766, %v762
    %v1247 = vpack.c.b16 %v767, %v763
    %v1248 = vpack.c.b16 %v768, %v764
    %v1249 = vpack.c.b16 %v769, %v765
    %v1250 = vpack.c.b16 %v774, %v770
    %v1251 = vpack.c.b16 %v775, %v771
    %v1252 = vpack.c.b16 %v776, %v772
    %v1253 = vpack.c.b16 %v777, %v773
    %v1254 = vpack.c.b16 %v782, %v778
    %v1255 = vpack.c.b16 %v783, %v779
    %v1256 = vpack.c.b16 %v784, %v780
    %v1257 = vpack.c.b16 %v785, %v781
    %v1258 = vpack.c.b16 %v790, %v786
    %v1259 = vpack.c.b16 %v791, %v787
    %v1260 = vpack.c.b16 %v792, %v788
    %v1261 = vpack.c.b16 %v793, %v789
    %v1262 = vpack.c.b16 %v798, %v794
    %v1263 = vpack.c.b16 %v799, %v795
    %v1264 = vpack.c.b16 %v800, %v796
    %v1265 = vpack.c.b16 %v801, %v797
    %v1266 = vpack.c.b16 %v806, %v802
    %v1267 = vpack.c.b16 %v807, %v803
    %v1268 = vpack.c.b16 %v808, %v804
    %v1269 = vpack.c.b16 %v809, %v805
    %v1270 = vpack.c.b16 %v814, %v810
    %v1271 = vpack.c.b16 %v815, %v811
    %v1272 = vpack.c.b16 %v816, %v812
    %v1273 = vpack.c.b16 %v817, %v813
    %v1274 = vpack.c.b16 %v822, %v818
    %v1275 = vpack.c.b16 %v823, %v819
    %v1276 = vpack.c.b16 %v824, %v820
    %v1277 = vpack.c.b16 %v825, %v821
    %v1278 = vpack.c.b16 %v830, %v826
    %v1279 = vpack.c.b16 %v831, %v827
    %v1280 = vpack.c.b16 %v832, %v828
    %v1281 = vpack.c.b16 %v833, %v829
    %v1282 = vpack.c.b16 %v838, %v834
    %v1283 = vpack.c.b16 %v839, %v835
    %v1284 = vpack.c.b16 %v840, %v836
    %v1285 = vpack.c.b16 %v841, %v837
    %v1286 = vpack.c.b16 %v846, %v842
    %v1287 = vpack.c.b16 %v847, %v843
    %v1288 = vpack.c.b16 %v848, %v844
    %v1289 = vpack.c.b16 %v849, %v845
    %v1290 = vpack.c.b16 %v854, %v850
    %v1291 = vpack.c.b16 %v855, %v851
    %v1292 = vpack.c.b16 %v856, %v852
    %v1293 = vpack.c.b16 %v857, %v853
    %v1294 = vpack.c.b16 %v862, %v858
    %v1295 = vpack.c.b16 %v863, %v859
    %v1296 = vpack.c.b16 %v864, %v860
    %v1297 = vpack.c.b16 %v865, %v861
    %v1298 = vpack.c.b16 %v870, %v866
    %v1299 = vpack.c.b16 %v871, %v867
    %v1300 = vpack.c.b16 %v872, %v868
    %v1301 = vpack.c.b16 %v873, %v869
    %v1302 = vpack.c.b16 %v878, %v874
    %v1303 = vpack.c.b16 %v879, %v875
    %v1304 = vpack.c.b16 %v880, %v876
    %v1305 = vpack.c.b16 %v881, %v877
    %v1306 = vpack.c.b16 %v886, %v882
    %v1307 = vpack.c.b16 %v887, %v883
    %v1308 = vpack.c.b16 %v888, %v884
    %v1309 = vpack.c.b16 %v889, %v885
    %v1310 = vpack.c.b16 %v894, %v890
    %v1311 = vpack.c.b16 %v895, %v891
    %v1312 = vpack.c.b16 %v896, %v892
    %v1313 = vpack.c.b16 %v897, %v893
    %v1314 = vpack.c.b16 %v902, %v898
    %v1315 = vpack.c.b16 %v903, %v899
    %v1316 = vpack.c.b16 %v904, %v900
    %v1317 = vpack.c.b16 %v905, %v901
    %v1318 = vpack.c.b16 %v910, %v906
    %v1319 = vpack.c.b16 %v911, %v907
    %v1320 = vpack.c.b16 %v912, %v908
    %v1321 = vpack.c.b16 %v913, %v909
    %v1322 = vpack.c.b16 %v918, %v914
    %v1323 = vpack.c.b16 %v919, %v915
    %v1324 = vpack.c.b16 %v920, %v916
    %v1325 = vpack.c.b16 %v921, %v917
    %v1326 = vpack.c.b16 %v926, %v922
    %v1327 = vpack.c.b16 %v927, %v923
    %v1328 = vpack.c.b16 %v928, %v924
    %v1329 = vpack.c.b16 %v929, %v925
    %v1330 = vpack.c.b16 %v934, %v930
    %v1331 = vpack.c.b16 %v935, %v931
    %v1332 = vpack.c.b16 %v936, %v932
    %v1333 = vpack.c.b16 %v937, %v933
    %v1334 = vpack.c.b16 %v942, %v938
    %v1335 = vpack.c.b16 %v943, %v939
    %v1336 = vpack.c.b16 %v944, %v940
    %v1337 = vpack.c.b16 %v945, %v941
    %v1338 = vpack.c.b16 %v950, %v946
    %v1339 = vpack.c.b16 %v951, %v947
    %v1340 = vpack.c.b16 %v952, %v948
    %v1341 = vpack.c.b16 %v953, %v949
    %v1342 = vpack.c.b16 %v958, %v954
    %v1343 = vpack.c.b16 %v959, %v955
    %v1344 = vpack.c.b16 %v960, %v956
    %v1345 = vpack.c.b16 %v961, %v957
    %v1346 = vpack.c.b16 %v966, %v962
    %v1347 = vpack.c.b16 %v967, %v963
    %v1348 = vpack.c.b16 %v968, %v964
    %v1349 = vpack.c.b16 %v969, %v965
    %v1350 = vpack.c.b16 %v974, %v970
    %v1351 = vpack.c.b16 %v975, %v971
    %v1352 = vpack.c.b16 %v976, %v972
    %v1353 = vpack.c.b16 %v977, %v973
    %v1354 = vpack.c.b16 %v982, %v978
    %v1355 = vpack.c.b16 %v983, %v979
    %v1356 = vpack.c.b16 %v984, %v980
    %v1357 = vpack.c.b16 %v985, %v981
    %v1358 = vpack.c.b16 %v990, %v986
    %v1359 = vpack.c.b16 %v991, %v987
    %v1360 = vpack.c.b16 %v992, %v988
    %v1361 = vpack.c.b16 %v993, %v989
    %v1362 = vpack.c.b16 %v998, %v994
    %v1363 = vpack.c.b16 %v999, %v995
    %v1364 = vpack.c.b16 %v1000, %v996
    %v1365 = vpack.c.b16 %v1001, %v997
    %v1366 = vpack.c.b16 %v1006, %v1002
    %v1367 = vpack.c.b16 %v1007, %v1003
    %v1368 = vpack.c.b16 %v1008, %v1004
    %v1369 = vpack.c.b16 %v1009, %v1005
    %v1370 = vpack.c.b16 %v1014, %v1010
    %v1371 = vpack.c.b16 %v1015, %v1011
    %v1372 = vpack.c.b16 %v1016, %v1012
    %v1373 = vpack.c.b16 %v1017, %v1013
    %v1374 = vpack.c.b16 %v1022, %v1018
    %v1375 = vpack.c.b16 %v1023, %v1019
    %v1376 = vpack.c.b16 %v1024, %v1020
    %v1377 = vpack.c.b16 %v1025, %v1021
    %v1378 = vpack.c.b16 %v1030, %v1026
    %v1379 = vpack.c.b16 %v1031, %v1027
    %v1380 = vpack.c.b16 %v1032, %v1028
    %v1381 = vpack.c.b16 %v1033, %v1029
    %v1382 = vpack.c.b16 %v1038, %v1034
    %v1383 = vpack.c.b16 %v1039, %v1035
    %v1384 = vpack.c.b16 %v1040, %v1036
    %v1385 = vpack.c.b16 %v1041, %v1037
    %v1386 = vpack.c.b16 %v1046, %v1042
    %v1387 = vpack.c.b16 %v1047, %v1043
    %v1388 = vpack.c.b16 %v1048, %v1044
    %v1389 = vpack.c.b16 %v1049, %v1045
    %v1390 = vpack.c.b16 %v1054, %v1050
    %v1391 = vpack.c.b16 %v1055, %v1051
    %v1392 = vpack.c.b16 %v1056, %v1052
    %v1393 = vpack.c.b16 %v1057, %v1053
    %v1394 = vpack.c.b16 %v1062, %v1058
    %v1395 = vpack.c.b16 %v1063, %v1059
    %v1396 = vpack.c.b16 %v1064, %v1060
    %v1397 = vpack.c.b16 %v1065, %v1061
    %v1398 = vpack.c.b16 %v1070, %v1066
    %v1399 = vpack.c.b16 %v1071, %v1067
    %v1400 = vpack.c.b16 %v1072, %v1068
    %v1401 = vpack.c.b16 %v1073, %v1069
    %v1402 = vpack.c.b16 %v1078, %v1074
    %v1403 = vpack.c.b16 %v1079, %v1075
    %v1404 = vpack.c.b16 %v1080, %v1076
    %v1405 = vpack.c.b16 %v1081, %v1077
    %v1406 = vpack.c.b16 %v1086, %v1082
    %v1407 = vpack.c.b16 %v1087, %v1083
    %v1408 = vpack.c.b16 %v1088, %v1084
    %v1409 = vpack.c.b16 %v1089, %v1085
    %v1410 = vpack.c.b16 %v1094, %v1090
    %v1411 = vpack.c.b16 %v1095, %v1091
    %v1412 = vpack.c.b16 %v1096, %v1092
    %v1413 = vpack.c.b16 %v1097, %v1093
    %v1414 = vpack.c.b16 %v1102, %v1098
    %v1415 = vpack.c.b16 %v1103, %v1099
    %v1416 = vpack.c.b16 %v1104, %v1100
    %v1417 = vpack.c.b16 %v1105, %v1101
    %v1418 = vpack.c.b16 %v1110, %v1106
    %v1419 = vpack.c.b16 %v1111, %v1107
    %v1420 = vpack.c.b16 %v1112, %v1108
    %v1421 = vpack.c.b16 %v1113, %v1109
    %v1422 = vpack.c.b16 %v1118, %v1114
    %v1423 = vpack.c.b16 %v1119, %v1115
    %v1424 = vpack.c.b16 %v1120, %v1116
    %v1425 = vpack.c.b16 %v1121, %v1117
    %v1426 = vpack.c.b16 %v1126, %v1122
    %v1427 = vpack.c.b16 %v1127, %v1123
    %v1428 = vpack.c.b16 %v1128, %v1124
    %v1429 = vpack.c.b16 %v1129, %v1125
    %v1430 = vpack.c.b16 %v1134, %v1130
    %v1431 = vpack.c.b16 %v1135, %v1131
    %v1432 = vpack.c.b16 %v1136, %v1132
    %v1433 = vpack.c.b16 %v1137, %v1133
    %v1434 = vpack.c.b16 %v1142, %v1138
    %v1435 = vpack.c.b16 %v1143, %v1139
    %v1436 = vpack.c.b16 %v1144, %v1140
    %v1437 = vpack.c.b16 %v1145, %v1141
    %v1438 = vpack.c.b16 %v1150, %v1146
    %v1439 = vpack.c.b16 %v1151, %v1147
    %v1440 = vpack.c.b16 %v1152, %v1148
    %v1441 = vpack.c.b16 %v1153, %v1149
    %v1442 = vpack.c.b16 %v1158, %v1154
    %v1443 = vpack.c.b16 %v1159, %v1155
    %v1444 = vpack.c.b16 %v1160, %v1156
    %v1445 = vpack.c.b16 %v1161, %v1157
    %v1446 = vpack.c.b16 %v1166, %v1162
    %v1447 = vpack.c.b16 %v1167, %v1163
    %v1448 = vpack.c.b16 %v1168, %v1164
    %v1449 = vpack.c.b16 %v1169, %v1165
    %v1450 = vpack.c.b16 %v1174, %v1170
    %v1451 = vpack.c.b16 %v1175, %v1171
    %v1452 = vpack.c.b16 %v1176, %v1172
    %v1453 = vpack.c.b16 %v1177, %v1173
    %v1454 = vpack.c.b16 %v1182, %v1178
    %v1455 = vpack.c.b16 %v1183, %v1179
    %v1456 = vpack.c.b16 %v1184, %v1180
    %v1457 = vpack.c.b16 %v1185, %v1181
    %v1458 = vpack.c.b16 %v1190, %v1186
    %v1459 = vpack.c.b16 %v1191, %v1187
    %v1460 = vpack.c.b16 %v1192, %v1188
    %v1461 = vpack.c.b16 %v1193, %v1189
    %v1462 = vpack.c.b16 %v1198, %v1194
    %v1463 = vpack.c.b16 %v1199, %v1195
    %v1464 = vpack.c.b16 %v1200, %v1196
    %v1465 = vpack.c.b16 %v1201, %v1197
    %v1466 = vpack.c.b16 %v1206, %v1202
    %v1467 = vpack.c.b16 %v1207, %v1203
    %v1468 = vpack.c.b16 %v1208, %v1204
    %v1469 = vpack.c.b16 %v1209, %v1205
    %v1470 = vpack.c.b16 %v1214, %v1210
    %v1471 = vpack.c.b16 %v1215, %v1211
    %v1472 = vpack.c.b16 %v1216, %v1212
    %v1473 = vpack.c.b16 %v1217, %v1213
    %1730 = vmatpush.bf16.msra.mxu0 %v1246
    %1731 = vmatpush.bf16.msra.mxu0 %v1242
    %1732 = vmatpush.bf16.msra.mxu0 %v1238
    %1733 = vmatpush.bf16.msra.mxu0 %v1234
    %1734 = vmatpush.bf16.msra.mxu0 %v1230
    %1735 = vmatpush.bf16.msra.mxu0 %v1226
    %1736 = vmatpush.bf16.msra.mxu0 %v1222
    %1737 = vmatpush.bf16.msra.mxu0 %v1218
    %1738 = vmatmul.bf16.gmra.mxu0 %v176
    %v1739 = vpop.f32.mrf.mxu0
    %v1740 = vadd.f32 %v442, %v1739
    %v1741 = vpop.f32.mrf.mxu0
    %v1742 = vadd.f32 %v442, %v1741
    %1743 = vdwg.mxu0
    %1744 = vmatpush.bf16.msra.mxu0 %v1278
    %1745 = vmatpush.bf16.msra.mxu0 %v1274
    %1746 = vmatpush.bf16.msra.mxu0 %v1270
    %1747 = vmatpush.bf16.msra.mxu0 %v1266
    %1748 = vmatpush.bf16.msra.mxu0 %v1262
    %1749 = vmatpush.bf16.msra.mxu0 %v1258
    %1750 = vmatpush.bf16.msra.mxu0 %v1254
    %1751 = vmatpush.bf16.msra.mxu0 %v1250
    %1752 = vmatmul.bf16.gmra.mxu0 %v177
    %v1753 = vpop.f32.mrf.mxu0
    %v1754 = vadd.f32 %v1740, %v1753
    %v1755 = vpop.f32.mrf.mxu0
    %v1756 = vadd.f32 %v1742, %v1755
    %1757 = vdwg.mxu0
    %1758 = vmatpush.bf16.msra.mxu0 %v1310
    %1759 = vmatpush.bf16.msra.mxu0 %v1306
    %1760 = vmatpush.bf16.msra.mxu0 %v1302
    %1761 = vmatpush.bf16.msra.mxu0 %v1298
    %1762 = vmatpush.bf16.msra.mxu0 %v1294
    %1763 = vmatpush.bf16.msra.mxu0 %v1290
    %1764 = vmatpush.bf16.msra.mxu0 %v1286
    %1765 = vmatpush.bf16.msra.mxu0 %v1282
    %1766 = vmatmul.bf16.gmra.mxu0 %v178
    %v1767 = vpop.f32.mrf.mxu0
    %v1768 = vadd.f32 %v1754, %v1767
    %v1769 = vpop.f32.mrf.mxu0
    %v1770 = vadd.f32 %v1756, %v1769
    %1771 = vdwg.mxu0
    %1772 = vmatpush.bf16.msra.mxu0 %v1342
    %1773 = vmatpush.bf16.msra.mxu0 %v1338
    %1774 = vmatpush.bf16.msra.mxu0 %v1334
    %1775 = vmatpush.bf16.msra.mxu0 %v1330
    %1776 = vmatpush.bf16.msra.mxu0 %v1326
    %1777 = vmatpush.bf16.msra.mxu0 %v1322
    %1778 = vmatpush.bf16.msra.mxu0 %v1318
    %1779 = vmatpush.bf16.msra.mxu0 %v1314
    %1780 = vmatmul.bf16.gmra.mxu0 %v179
    %v1781 = vpop.f32.mrf.mxu0
    %v1782 = vadd.f32 %v1768, %v1781
    %v1783 = vpop.f32.mrf.mxu0
    %v1784 = vadd.f32 %v1770, %v1783
    %1785 = vdwg.mxu0
    %1786 = vmatpush.bf16.msra.mxu0 %v1374
    %1787 = vmatpush.bf16.msra.mxu0 %v1370
    %1788 = vmatpush.bf16.msra.mxu0 %v1366
    %1789 = vmatpush.bf16.msra.mxu0 %v1362
    %1790 = vmatpush.bf16.msra.mxu0 %v1358
    %1791 = vmatpush.bf16.msra.mxu0 %v1354
    %1792 = vmatpush.bf16.msra.mxu0 %v1350
    %1793 = vmatpush.bf16.msra.mxu0 %v1346
    %1794 = vmatmul.bf16.gmra.mxu0 %v180
    %v1795 = vpop.f32.mrf.mxu0
    %v1796 = vadd.f32 %v1782, %v1795
    %v1797 = vpop.f32.mrf.mxu0
    %v1798 = vadd.f32 %v1784, %v1797
    %1799 = vdwg.mxu0
    %1800 = vmatpush.bf16.msra.mxu0 %v1406
    %1801 = vmatpush.bf16.msra.mxu0 %v1402
    %1802 = vmatpush.bf16.msra.mxu0 %v1398
    %1803 = vmatpush.bf16.msra.mxu0 %v1394
    %1804 = vmatpush.bf16.msra.mxu0 %v1390
    %1805 = vmatpush.bf16.msra.mxu0 %v1386
    %1806 = vmatpush.bf16.msra.mxu0 %v1382
    %1807 = vmatpush.bf16.msra.mxu0 %v1378
    %1808 = vmatmul.bf16.gmra.mxu0 %v181
    %v1809 = vpop.f32.mrf.mxu0
    %v1810 = vadd.f32 %v1796, %v1809
    %v1811 = vpop.f32.mrf.mxu0
    %v1812 = vadd.f32 %v1798, %v1811
    %1813 = vdwg.mxu0
    %1814 = vmatpush.bf16.msra.mxu0 %v1438
    %1815 = vmatpush.bf16.msra.mxu0 %v1434
    %1816 = vmatpush.bf16.msra.mxu0 %v1430
    %1817 = vmatpush.bf16.msra.mxu0 %v1426
    %1818 = vmatpush.bf16.msra.mxu0 %v1422
    %1819 = vmatpush.bf16.msra.mxu0 %v1418
    %1820 = vmatpush.bf16.msra.mxu0 %v1414
    %1821 = vmatpush.bf16.msra.mxu0 %v1410
    %1822 = vmatmul.bf16.gmra.mxu0 %v182
    %v1823 = vpop.f32.mrf.mxu0
    %v1824 = vadd.f32 %v1810, %v1823
    %v1825 = vpop.f32.mrf.mxu0
    %v1826 = vadd.f32 %v1812, %v1825
    %1827 = vdwg.mxu0
    %1828 = vmatpush.bf16.msra.mxu0 %v1470
    %1829 = vmatpush.bf16.msra.mxu0 %v1466
    %1830 = vmatpush.bf16.msra.mxu0 %v1462
    %1831 = vmatpush.bf16.msra.mxu0 %v1458
    %1832 = vmatpush.bf16.msra.mxu0 %v1454
    %1833 = vmatpush.bf16.msra.mxu0 %v1450
    %1834 = vmatpush.bf16.msra.mxu0 %v1446
    %1835 = vmatpush.bf16.msra.mxu0 %v1442
    %1836 = vmatmul.bf16.gmra.mxu0 %v183
    %v1837 = vpop.f32.mrf.mxu0
    %v1838 = vadd.f32 %v1824, %v1837
    %v1839 = vpop.f32.mrf.mxu0
    %v1840 = vadd.f32 %v1826, %v1839
    %1841 = vdwg.mxu0
    %1842 = vmatpush.bf16.msra.mxu0 %v1247
    %1843 = vmatpush.bf16.msra.mxu0 %v1243
    %1844 = vmatpush.bf16.msra.mxu0 %v1239
    %1845 = vmatpush.bf16.msra.mxu0 %v1235
    %1846 = vmatpush.bf16.msra.mxu0 %v1231
    %1847 = vmatpush.bf16.msra.mxu0 %v1227
    %1848 = vmatpush.bf16.msra.mxu0 %v1223
    %1849 = vmatpush.bf16.msra.mxu0 %v1219
    %1850 = vmatmul.bf16.gmra.mxu0 %v176
    %v1851 = vpop.f32.mrf.mxu0
    %v1852 = vadd.f32 %v443, %v1851
    %v1853 = vpop.f32.mrf.mxu0
    %v1854 = vadd.f32 %v443, %v1853
    %1855 = vdwg.mxu0
    %1856 = vmatpush.bf16.msra.mxu0 %v1279
    %1857 = vmatpush.bf16.msra.mxu0 %v1275
    %1858 = vmatpush.bf16.msra.mxu0 %v1271
    %1859 = vmatpush.bf16.msra.mxu0 %v1267
    %1860 = vmatpush.bf16.msra.mxu0 %v1263
    %1861 = vmatpush.bf16.msra.mxu0 %v1259
    %1862 = vmatpush.bf16.msra.mxu0 %v1255
    %1863 = vmatpush.bf16.msra.mxu0 %v1251
    %1864 = vmatmul.bf16.gmra.mxu0 %v177
    %v1865 = vpop.f32.mrf.mxu0
    %v1866 = vadd.f32 %v1852, %v1865
    %v1867 = vpop.f32.mrf.mxu0
    %v1868 = vadd.f32 %v1854, %v1867
    %1869 = vdwg.mxu0
    %1870 = vmatpush.bf16.msra.mxu0 %v1311
    %1871 = vmatpush.bf16.msra.mxu0 %v1307
    %1872 = vmatpush.bf16.msra.mxu0 %v1303
    %1873 = vmatpush.bf16.msra.mxu0 %v1299
    %1874 = vmatpush.bf16.msra.mxu0 %v1295
    %1875 = vmatpush.bf16.msra.mxu0 %v1291
    %1876 = vmatpush.bf16.msra.mxu0 %v1287
    %1877 = vmatpush.bf16.msra.mxu0 %v1283
    %1878 = vmatmul.bf16.gmra.mxu0 %v178
    %v1879 = vpop.f32.mrf.mxu0
    %v1880 = vadd.f32 %v1866, %v1879
    %v1881 = vpop.f32.mrf.mxu0
    %v1882 = vadd.f32 %v1868, %v1881
    %1883 = vdwg.mxu0
    %1884 = vmatpush.bf16.msra.mxu0 %v1343
    %1885 = vmatpush.bf16.msra.mxu0 %v1339
    %1886 = vmatpush.bf16.msra.mxu0 %v1335
    %1887 = vmatpush.bf16.msra.mxu0 %v1331
    %1888 = vmatpush.bf16.msra.mxu0 %v1327
    %1889 = vmatpush.bf16.msra.mxu0 %v1323
    %1890 = vmatpush.bf16.msra.mxu0 %v1319
    %1891 = vmatpush.bf16.msra.mxu0 %v1315
    %1892 = vmatmul.bf16.gmra.mxu0 %v179
    %v1893 = vpop.f32.mrf.mxu0
    %v1894 = vadd.f32 %v1880, %v1893
    %v1895 = vpop.f32.mrf.mxu0
    %v1896 = vadd.f32 %v1882, %v1895
    %1897 = vdwg.mxu0
    %1898 = vmatpush.bf16.msra.mxu0 %v1375
    %1899 = vmatpush.bf16.msra.mxu0 %v1371
    %1900 = vmatpush.bf16.msra.mxu0 %v1367
    %1901 = vmatpush.bf16.msra.mxu0 %v1363
    %1902 = vmatpush.bf16.msra.mxu0 %v1359
    %1903 = vmatpush.bf16.msra.mxu0 %v1355
    %1904 = vmatpush.bf16.msra.mxu0 %v1351
    %1905 = vmatpush.bf16.msra.mxu0 %v1347
    %1906 = vmatmul.bf16.gmra.mxu0 %v180
    %v1907 = vpop.f32.mrf.mxu0
    %v1908 = vadd.f32 %v1894, %v1907
    %v1909 = vpop.f32.mrf.mxu0
    %v1910 = vadd.f32 %v1896, %v1909
    %1911 = vdwg.mxu0
    %1912 = vmatpush.bf16.msra.mxu0 %v1407
    %1913 = vmatpush.bf16.msra.mxu0 %v1403
    %1914 = vmatpush.bf16.msra.mxu0 %v1399
    %1915 = vmatpush.bf16.msra.mxu0 %v1395
    %1916 = vmatpush.bf16.msra.mxu0 %v1391
    %1917 = vmatpush.bf16.msra.mxu0 %v1387
    %1918 = vmatpush.bf16.msra.mxu0 %v1383
    %1919 = vmatpush.bf16.msra.mxu0 %v1379
    %1920 = vmatmul.bf16.gmra.mxu0 %v181
    %v1921 = vpop.f32.mrf.mxu0
    %v1922 = vadd.f32 %v1908, %v1921
    %v1923 = vpop.f32.mrf.mxu0
    %v1924 = vadd.f32 %v1910, %v1923
    %1925 = vdwg.mxu0
    %1926 = vmatpush.bf16.msra.mxu0 %v1439
    %1927 = vmatpush.bf16.msra.mxu0 %v1435
    %1928 = vmatpush.bf16.msra.mxu0 %v1431
    %1929 = vmatpush.bf16.msra.mxu0 %v1427
    %1930 = vmatpush.bf16.msra.mxu0 %v1423
    %1931 = vmatpush.bf16.msra.mxu0 %v1419
    %1932 = vmatpush.bf16.msra.mxu0 %v1415
    %1933 = vmatpush.bf16.msra.mxu0 %v1411
    %1934 = vmatmul.bf16.gmra.mxu0 %v182
    %v1935 = vpop.f32.mrf.mxu0
    %v1936 = vadd.f32 %v1922, %v1935
    %v1937 = vpop.f32.mrf.mxu0
    %v1938 = vadd.f32 %v1924, %v1937
    %1939 = vdwg.mxu0
    %1940 = vmatpush.bf16.msra.mxu0 %v1471
    %1941 = vmatpush.bf16.msra.mxu0 %v1467
    %1942 = vmatpush.bf16.msra.mxu0 %v1463
    %1943 = vmatpush.bf16.msra.mxu0 %v1459
    %1944 = vmatpush.bf16.msra.mxu0 %v1455
    %1945 = vmatpush.bf16.msra.mxu0 %v1451
    %1946 = vmatpush.bf16.msra.mxu0 %v1447
    %1947 = vmatpush.bf16.msra.mxu0 %v1443
    %1948 = vmatmul.bf16.gmra.mxu0 %v183
    %v1949 = vpop.f32.mrf.mxu0
    %v1950 = vadd.f32 %v1936, %v1949
    %v1951 = vpop.f32.mrf.mxu0
    %v1952 = vadd.f32 %v1938, %v1951
    %1953 = vdwg.mxu0
    %1954 = vmatpush.bf16.msra.mxu0 %v1248
    %1955 = vmatpush.bf16.msra.mxu0 %v1244
    %1956 = vmatpush.bf16.msra.mxu0 %v1240
    %1957 = vmatpush.bf16.msra.mxu0 %v1236
    %1958 = vmatpush.bf16.msra.mxu0 %v1232
    %1959 = vmatpush.bf16.msra.mxu0 %v1228
    %1960 = vmatpush.bf16.msra.mxu0 %v1224
    %1961 = vmatpush.bf16.msra.mxu0 %v1220
    %1962 = vmatmul.bf16.gmra.mxu0 %v176
    %v1963 = vpop.f32.mrf.mxu0
    %v1964 = vadd.f32 %v444, %v1963
    %v1965 = vpop.f32.mrf.mxu0
    %v1966 = vadd.f32 %v444, %v1965
    %1967 = vdwg.mxu0
    %1968 = vmatpush.bf16.msra.mxu0 %v1280
    %1969 = vmatpush.bf16.msra.mxu0 %v1276
    %1970 = vmatpush.bf16.msra.mxu0 %v1272
    %1971 = vmatpush.bf16.msra.mxu0 %v1268
    %1972 = vmatpush.bf16.msra.mxu0 %v1264
    %1973 = vmatpush.bf16.msra.mxu0 %v1260
    %1974 = vmatpush.bf16.msra.mxu0 %v1256
    %1975 = vmatpush.bf16.msra.mxu0 %v1252
    %1976 = vmatmul.bf16.gmra.mxu0 %v177
    %v1977 = vpop.f32.mrf.mxu0
    %v1978 = vadd.f32 %v1964, %v1977
    %v1979 = vpop.f32.mrf.mxu0
    %v1980 = vadd.f32 %v1966, %v1979
    %1981 = vdwg.mxu0
    %1982 = vmatpush.bf16.msra.mxu0 %v1312
    %1983 = vmatpush.bf16.msra.mxu0 %v1308
    %1984 = vmatpush.bf16.msra.mxu0 %v1304
    %1985 = vmatpush.bf16.msra.mxu0 %v1300
    %1986 = vmatpush.bf16.msra.mxu0 %v1296
    %1987 = vmatpush.bf16.msra.mxu0 %v1292
    %1988 = vmatpush.bf16.msra.mxu0 %v1288
    %1989 = vmatpush.bf16.msra.mxu0 %v1284
    %1990 = vmatmul.bf16.gmra.mxu0 %v178
    %v1991 = vpop.f32.mrf.mxu0
    %v1992 = vadd.f32 %v1978, %v1991
    %v1993 = vpop.f32.mrf.mxu0
    %v1994 = vadd.f32 %v1980, %v1993
    %1995 = vdwg.mxu0
    %1996 = vmatpush.bf16.msra.mxu0 %v1344
    %1997 = vmatpush.bf16.msra.mxu0 %v1340
    %1998 = vmatpush.bf16.msra.mxu0 %v1336
    %1999 = vmatpush.bf16.msra.mxu0 %v1332
    %2000 = vmatpush.bf16.msra.mxu0 %v1328
    %2001 = vmatpush.bf16.msra.mxu0 %v1324
    %2002 = vmatpush.bf16.msra.mxu0 %v1320
    %2003 = vmatpush.bf16.msra.mxu0 %v1316
    %2004 = vmatmul.bf16.gmra.mxu0 %v179
    %v2005 = vpop.f32.mrf.mxu0
    %v2006 = vadd.f32 %v1992, %v2005
    %v2007 = vpop.f32.mrf.mxu0
    %v2008 = vadd.f32 %v1994, %v2007
    %2009 = vdwg.mxu0
    %2010 = vmatpush.bf16.msra.mxu0 %v1376
    %2011 = vmatpush.bf16.msra.mxu0 %v1372
    %2012 = vmatpush.bf16.msra.mxu0 %v1368
    %2013 = vmatpush.bf16.msra.mxu0 %v1364
    %2014 = vmatpush.bf16.msra.mxu0 %v1360
    %2015 = vmatpush.bf16.msra.mxu0 %v1356
    %2016 = vmatpush.bf16.msra.mxu0 %v1352
    %2017 = vmatpush.bf16.msra.mxu0 %v1348
    %2018 = vmatmul.bf16.gmra.mxu0 %v180
    %v2019 = vpop.f32.mrf.mxu0
    %v2020 = vadd.f32 %v2006, %v2019
    %v2021 = vpop.f32.mrf.mxu0
    %v2022 = vadd.f32 %v2008, %v2021
    %2023 = vdwg.mxu0
    %2024 = vmatpush.bf16.msra.mxu0 %v1408
    %2025 = vmatpush.bf16.msra.mxu0 %v1404
    %2026 = vmatpush.bf16.msra.mxu0 %v1400
    %2027 = vmatpush.bf16.msra.mxu0 %v1396
    %2028 = vmatpush.bf16.msra.mxu0 %v1392
    %2029 = vmatpush.bf16.msra.mxu0 %v1388
    %2030 = vmatpush.bf16.msra.mxu0 %v1384
    %2031 = vmatpush.bf16.msra.mxu0 %v1380
    %2032 = vmatmul.bf16.gmra.mxu0 %v181
    %v2033 = vpop.f32.mrf.mxu0
    %v2034 = vadd.f32 %v2020, %v2033
    %v2035 = vpop.f32.mrf.mxu0
    %v2036 = vadd.f32 %v2022, %v2035
    %2037 = vdwg.mxu0
    %2038 = vmatpush.bf16.msra.mxu0 %v1440
    %2039 = vmatpush.bf16.msra.mxu0 %v1436
    %2040 = vmatpush.bf16.msra.mxu0 %v1432
    %2041 = vmatpush.bf16.msra.mxu0 %v1428
    %2042 = vmatpush.bf16.msra.mxu0 %v1424
    %2043 = vmatpush.bf16.msra.mxu0 %v1420
    %2044 = vmatpush.bf16.msra.mxu0 %v1416
    %2045 = vmatpush.bf16.msra.mxu0 %v1412
    %2046 = vmatmul.bf16.gmra.mxu0 %v182
    %v2047 = vpop.f32.mrf.mxu0
    %v2048 = vadd.f32 %v2034, %v2047
    %v2049 = vpop.f32.mrf.mxu0
    %v2050 = vadd.f32 %v2036, %v2049
    %2051 = vdwg.mxu0
    %2052 = vmatpush.bf16.msra.mxu0 %v1472
    %2053 = vmatpush.bf16.msra.mxu0 %v1468
    %2054 = vmatpush.bf16.msra.mxu0 %v1464
    %2055 = vmatpush.bf16.msra.mxu0 %v1460
    %2056 = vmatpush.bf16.msra.mxu0 %v1456
    %2057 = vmatpush.bf16.msra.mxu0 %v1452
    %2058 = vmatpush.bf16.msra.mxu0 %v1448
    %2059 = vmatpush.bf16.msra.mxu0 %v1444
    %2060 = vmatmul.bf16.gmra.mxu0 %v183
    %v2061 = vpop.f32.mrf.mxu0
    %v2062 = vadd.f32 %v2048, %v2061
    %v2063 = vpop.f32.mrf.mxu0
    %v2064 = vadd.f32 %v2050, %v2063
    %2065 = vdwg.mxu0
    %2066 = vmatpush.bf16.msra.mxu0 %v1249
    %2067 = vmatpush.bf16.msra.mxu0 %v1245
    %2068 = vmatpush.bf16.msra.mxu0 %v1241
    %2069 = vmatpush.bf16.msra.mxu0 %v1237
    %2070 = vmatpush.bf16.msra.mxu0 %v1233
    %2071 = vmatpush.bf16.msra.mxu0 %v1229
    %2072 = vmatpush.bf16.msra.mxu0 %v1225
    %2073 = vmatpush.bf16.msra.mxu0 %v1221
    %2074 = vmatmul.bf16.gmra.mxu0 %v176
    %v2075 = vpop.f32.mrf.mxu0
    %v2076 = vadd.f32 %v445, %v2075
    %v2077 = vpop.f32.mrf.mxu0
    %v2078 = vadd.f32 %v445, %v2077
    %2079 = vdwg.mxu0
    %2080 = vmatpush.bf16.msra.mxu0 %v1281
    %2081 = vmatpush.bf16.msra.mxu0 %v1277
    %2082 = vmatpush.bf16.msra.mxu0 %v1273
    %2083 = vmatpush.bf16.msra.mxu0 %v1269
    %2084 = vmatpush.bf16.msra.mxu0 %v1265
    %2085 = vmatpush.bf16.msra.mxu0 %v1261
    %2086 = vmatpush.bf16.msra.mxu0 %v1257
    %2087 = vmatpush.bf16.msra.mxu0 %v1253
    %2088 = vmatmul.bf16.gmra.mxu0 %v177
    %v2089 = vpop.f32.mrf.mxu0
    %v2090 = vadd.f32 %v2076, %v2089
    %v2091 = vpop.f32.mrf.mxu0
    %v2092 = vadd.f32 %v2078, %v2091
    %2093 = vdwg.mxu0
    %2094 = vmatpush.bf16.msra.mxu0 %v1313
    %2095 = vmatpush.bf16.msra.mxu0 %v1309
    %2096 = vmatpush.bf16.msra.mxu0 %v1305
    %2097 = vmatpush.bf16.msra.mxu0 %v1301
    %2098 = vmatpush.bf16.msra.mxu0 %v1297
    %2099 = vmatpush.bf16.msra.mxu0 %v1293
    %2100 = vmatpush.bf16.msra.mxu0 %v1289
    %2101 = vmatpush.bf16.msra.mxu0 %v1285
    %2102 = vmatmul.bf16.gmra.mxu0 %v178
    %v2103 = vpop.f32.mrf.mxu0
    %v2104 = vadd.f32 %v2090, %v2103
    %v2105 = vpop.f32.mrf.mxu0
    %v2106 = vadd.f32 %v2092, %v2105
    %2107 = vdwg.mxu0
    %2108 = vmatpush.bf16.msra.mxu0 %v1345
    %2109 = vmatpush.bf16.msra.mxu0 %v1341
    %2110 = vmatpush.bf16.msra.mxu0 %v1337
    %2111 = vmatpush.bf16.msra.mxu0 %v1333
    %2112 = vmatpush.bf16.msra.mxu0 %v1329
    %2113 = vmatpush.bf16.msra.mxu0 %v1325
    %2114 = vmatpush.bf16.msra.mxu0 %v1321
    %2115 = vmatpush.bf16.msra.mxu0 %v1317
    %2116 = vmatmul.bf16.gmra.mxu0 %v179
    %v2117 = vpop.f32.mrf.mxu0
    %v2118 = vadd.f32 %v2104, %v2117
    %v2119 = vpop.f32.mrf.mxu0
    %v2120 = vadd.f32 %v2106, %v2119
    %2121 = vdwg.mxu0
    %2122 = vmatpush.bf16.msra.mxu0 %v1377
    %2123 = vmatpush.bf16.msra.mxu0 %v1373
    %2124 = vmatpush.bf16.msra.mxu0 %v1369
    %2125 = vmatpush.bf16.msra.mxu0 %v1365
    %2126 = vmatpush.bf16.msra.mxu0 %v1361
    %2127 = vmatpush.bf16.msra.mxu0 %v1357
    %2128 = vmatpush.bf16.msra.mxu0 %v1353
    %2129 = vmatpush.bf16.msra.mxu0 %v1349
    %2130 = vmatmul.bf16.gmra.mxu0 %v180
    %v2131 = vpop.f32.mrf.mxu0
    %v2132 = vadd.f32 %v2118, %v2131
    %v2133 = vpop.f32.mrf.mxu0
    %v2134 = vadd.f32 %v2120, %v2133
    %2135 = vdwg.mxu0
    %2136 = vmatpush.bf16.msra.mxu0 %v1409
    %2137 = vmatpush.bf16.msra.mxu0 %v1405
    %2138 = vmatpush.bf16.msra.mxu0 %v1401
    %2139 = vmatpush.bf16.msra.mxu0 %v1397
    %2140 = vmatpush.bf16.msra.mxu0 %v1393
    %2141 = vmatpush.bf16.msra.mxu0 %v1389
    %2142 = vmatpush.bf16.msra.mxu0 %v1385
    %2143 = vmatpush.bf16.msra.mxu0 %v1381
    %2144 = vmatmul.bf16.gmra.mxu0 %v181
    %v2145 = vpop.f32.mrf.mxu0
    %v2146 = vadd.f32 %v2132, %v2145
    %v2147 = vpop.f32.mrf.mxu0
    %v2148 = vadd.f32 %v2134, %v2147
    %2149 = vdwg.mxu0
    %2150 = vmatpush.bf16.msra.mxu0 %v1441
    %2151 = vmatpush.bf16.msra.mxu0 %v1437
    %2152 = vmatpush.bf16.msra.mxu0 %v1433
    %2153 = vmatpush.bf16.msra.mxu0 %v1429
    %2154 = vmatpush.bf16.msra.mxu0 %v1425
    %2155 = vmatpush.bf16.msra.mxu0 %v1421
    %2156 = vmatpush.bf16.msra.mxu0 %v1417
    %2157 = vmatpush.bf16.msra.mxu0 %v1413
    %2158 = vmatmul.bf16.gmra.mxu0 %v182
    %v2159 = vpop.f32.mrf.mxu0
    %v2160 = vadd.f32 %v2146, %v2159
    %v2161 = vpop.f32.mrf.mxu0
    %v2162 = vadd.f32 %v2148, %v2161
    %2163 = vdwg.mxu0
    %2164 = vmatpush.bf16.msra.mxu0 %v1473
    %2165 = vmatpush.bf16.msra.mxu0 %v1469
    %2166 = vmatpush.bf16.msra.mxu0 %v1465
    %2167 = vmatpush.bf16.msra.mxu0 %v1461
    %2168 = vmatpush.bf16.msra.mxu0 %v1457
    %2169 = vmatpush.bf16.msra.mxu0 %v1453
    %2170 = vmatpush.bf16.msra.mxu0 %v1449
    %2171 = vmatpush.bf16.msra.mxu0 %v1445
    %2172 = vmatmul.bf16.gmra.mxu0 %v183
    %v2173 = vpop.f32.mrf.mxu0
    %v2174 = vadd.f32 %v2160, %v2173
    %v2175 = vpop.f32.mrf.mxu0
    %v2176 = vadd.f32 %v2162, %v2175
    %2177 = vdwg.mxu0
    %v2178 = vmax.f32 %v1838, 0.0
    %v2179 = vmax.f32 %v1950, 0.0
    %v2180 = vmax.f32 %v2062, 0.0
    %v2181 = vmax.f32 %v2174, 0.0
    %v2182 = vmax.f32 %v1840, 0.0
    %v2183 = vmax.f32 %v1952, 0.0
    %v2184 = vmax.f32 %v2064, 0.0
    %v2185 = vmax.f32 %v2176, 0.0
    %v2186 = vpack.c.bf16 %v2182, %v2178
    %v2187 = vpack.c.bf16 %v2183, %v2179
    %v2188 = vpack.c.bf16 %v2184, %v2180
    %v2189 = vpack.c.bf16 %v2185, %v2181
    %v2190 = vld [vmem:[#allocation8] sm:$0xf]
    %v2191 = vld [vmem:[#allocation8 + $0x4] sm:$0xf]
    %v2192 = vld [vmem:[#allocation8 + $0x8] sm:$0xf]
    %v2193 = vld [vmem:[#allocation8 + $0xc] sm:$0xf]
    %v2194 = vld [vmem:[#allocation8 + $0x10] sm:$0xf]
    %v2195 = vld [vmem:[#allocation8 + $0x14] sm:$0xf]
    %v2196 = vld [vmem:[#allocation8 + $0x18] sm:$0xf]
    %v2197 = vld [vmem:[#allocation8 + $0x1c] sm:$0xf]
    %v2198 = vld [vmem:[#allocation8 + $0x20] sm:$0xf]
    %v2199 = vld [vmem:[#allocation8 + $0x24] sm:$0xf]
    %v2200 = vld [vmem:[#allocation8 + $0x28] sm:$0xf]
    %v2201 = vld [vmem:[#allocation8 + $0x2c] sm:$0xf]
    %v2202 = vld [vmem:[#allocation8 + $0x30] sm:$0xf]
    %v2203 = vld [vmem:[#allocation8 + $0x34] sm:$0xf]
    %v2204 = vld [vmem:[#allocation8 + $0x38] sm:$0xf]
    %v2205 = vld [vmem:[#allocation8 + $0x3c] sm:$0xf]
    %v2206 = vld [vmem:[#allocation8 + $0x40] sm:$0xf]
    %v2207 = vld [vmem:[#allocation8 + $0x44] sm:$0xf]
    %v2208 = vld [vmem:[#allocation8 + $0x48] sm:$0xf]
    %v2209 = vld [vmem:[#allocation8 + $0x4c] sm:$0xf]
    %v2210 = vld [vmem:[#allocation8 + $0x50] sm:$0xf]
    %v2211 = vld [vmem:[#allocation8 + $0x54] sm:$0xf]
    %v2212 = vld [vmem:[#allocation8 + $0x58] sm:$0xf]
    %v2213 = vld [vmem:[#allocation8 + $0x5c] sm:$0xf]
    %v2214 = vld [vmem:[#allocation8 + $0x60] sm:$0xf]
    %v2215 = vld [vmem:[#allocation8 + $0x64] sm:$0xf]
    %v2216 = vld [vmem:[#allocation8 + $0x68] sm:$0xf]
    %v2217 = vld [vmem:[#allocation8 + $0x6c] sm:$0xf]
    %v2218 = vld [vmem:[#allocation8 + $0x70] sm:$0xf]
    %v2219 = vld [vmem:[#allocation8 + $0x74] sm:$0xf]
    %v2220 = vld [vmem:[#allocation8 + $0x78] sm:$0xf]
    %v2221 = vld [vmem:[#allocation8 + $0x7c] sm:$0xf]
    %v2222 = vld [vmem:[#allocation8 + $0x80] sm:$0xf]
    %v2223 = vld [vmem:[#allocation8 + $0x84] sm:$0xf]
    %v2224 = vld [vmem:[#allocation8 + $0x88] sm:$0xf]
    %v2225 = vld [vmem:[#allocation8 + $0x8c] sm:$0xf]
    %v2226 = vld [vmem:[#allocation8 + $0x90] sm:$0xf]
    %v2227 = vld [vmem:[#allocation8 + $0x94] sm:$0xf]
    %v2228 = vld [vmem:[#allocation8 + $0x98] sm:$0xf]
    %v2229 = vld [vmem:[#allocation8 + $0x9c] sm:$0xf]
    %v2230 = vld [vmem:[#allocation8 + $0xa0] sm:$0xf]
    %v2231 = vld [vmem:[#allocation8 + $0xa4] sm:$0xf]
    %v2232 = vld [vmem:[#allocation8 + $0xa8] sm:$0xf]
    %v2233 = vld [vmem:[#allocation8 + $0xac] sm:$0xf]
    %v2234 = vld [vmem:[#allocation8 + $0xb0] sm:$0xf]
    %v2235 = vld [vmem:[#allocation8 + $0xb4] sm:$0xf]
    %v2236 = vld [vmem:[#allocation8 + $0xb8] sm:$0xf]
    %v2237 = vld [vmem:[#allocation8 + $0xbc] sm:$0xf]
    %v2238 = vld [vmem:[#allocation8 + $0xc0] sm:$0xf]
    %v2239 = vld [vmem:[#allocation8 + $0xc4] sm:$0xf]
    %v2240 = vld [vmem:[#allocation8 + $0xc8] sm:$0xf]
    %v2241 = vld [vmem:[#allocation8 + $0xcc] sm:$0xf]
    %v2242 = vld [vmem:[#allocation8 + $0xd0] sm:$0xf]
    %v2243 = vld [vmem:[#allocation8 + $0xd4] sm:$0xf]
    %v2244 = vld [vmem:[#allocation8 + $0xd8] sm:$0xf]
    %v2245 = vld [vmem:[#allocation8 + $0xdc] sm:$0xf]
    %v2246 = vld [vmem:[#allocation8 + $0xe0] sm:$0xf]
    %v2247 = vld [vmem:[#allocation8 + $0xe4] sm:$0xf]
    %v2248 = vld [vmem:[#allocation8 + $0xe8] sm:$0xf]
    %v2249 = vld [vmem:[#allocation8 + $0xec] sm:$0xf]
    %v2250 = vld [vmem:[#allocation8 + $0xf0] sm:$0xf]
    %v2251 = vld [vmem:[#allocation8 + $0xf4] sm:$0xf]
    %v2252 = vld [vmem:[#allocation8 + $0xf8] sm:$0xf]
    %v2253 = vld [vmem:[#allocation8 + $0xfc] sm:$0xf]
    %v2254 = vld [vmem:[%s4] sm:$0x1]
    %v2256 = vperm.slane %v2254, 0
    %v2322 = vunpack.c.l.b16 %v2190
    %v2323 = vunpack.c.l.b16 %v2191
    %v2324 = vunpack.c.l.b16 %v2192
    %v2325 = vunpack.c.l.b16 %v2193
    %v2326 = vunpack.c.l.b16 %v2194
    %v2327 = vunpack.c.l.b16 %v2195
    %v2328 = vunpack.c.l.b16 %v2196
    %v2329 = vunpack.c.l.b16 %v2197
    %v2330 = vunpack.c.l.b16 %v2198
    %v2331 = vunpack.c.l.b16 %v2199
    %v2332 = vunpack.c.l.b16 %v2200
    %v2333 = vunpack.c.l.b16 %v2201
    %v2334 = vunpack.c.l.b16 %v2202
    %v2335 = vunpack.c.l.b16 %v2203
    %v2336 = vunpack.c.l.b16 %v2204
    %v2337 = vunpack.c.l.b16 %v2205
    %v2338 = vunpack.c.l.b16 %v2206
    %v2339 = vunpack.c.l.b16 %v2207
    %v2340 = vunpack.c.l.b16 %v2208
    %v2341 = vunpack.c.l.b16 %v2209
    %v2342 = vunpack.c.l.b16 %v2210
    %v2343 = vunpack.c.l.b16 %v2211
    %v2344 = vunpack.c.l.b16 %v2212
    %v2345 = vunpack.c.l.b16 %v2213
    %v2346 = vunpack.c.l.b16 %v2214
    %v2347 = vunpack.c.l.b16 %v2215
    %v2348 = vunpack.c.l.b16 %v2216
    %v2349 = vunpack.c.l.b16 %v2217
    %v2350 = vunpack.c.l.b16 %v2218
    %v2351 = vunpack.c.l.b16 %v2219
    %v2352 = vunpack.c.l.b16 %v2220
    %v2353 = vunpack.c.l.b16 %v2221
    %v2354 = vunpack.c.l.b16 %v2222
    %v2355 = vunpack.c.l.b16 %v2223
    %v2356 = vunpack.c.l.b16 %v2224
    %v2357 = vunpack.c.l.b16 %v2225
    %v2358 = vunpack.c.l.b16 %v2226
    %v2359 = vunpack.c.l.b16 %v2227
    %v2360 = vunpack.c.l.b16 %v2228
    %v2361 = vunpack.c.l.b16 %v2229
    %v2362 = vunpack.c.l.b16 %v2230
    %v2363 = vunpack.c.l.b16 %v2231
    %v2364 = vunpack.c.l.b16 %v2232
    %v2365 = vunpack.c.l.b16 %v2233
    %v2366 = vunpack.c.l.b16 %v2234
    %v2367 = vunpack.c.l.b16 %v2235
    %v2368 = vunpack.c.l.b16 %v2236
    %v2369 = vunpack.c.l.b16 %v2237
    %v2370 = vunpack.c.l.b16 %v2238
    %v2371 = vunpack.c.l.b16 %v2239
    %v2372 = vunpack.c.l.b16 %v2240
    %v2373 = vunpack.c.l.b16 %v2241
    %v2374 = vunpack.c.l.b16 %v2242
    %v2375 = vunpack.c.l.b16 %v2243
    %v2376 = vunpack.c.l.b16 %v2244
    %v2377 = vunpack.c.l.b16 %v2245
    %v2378 = vunpack.c.l.b16 %v2246
    %v2379 = vunpack.c.l.b16 %v2247
    %v2380 = vunpack.c.l.b16 %v2248
    %v2381 = vunpack.c.l.b16 %v2249
    %v2382 = vunpack.c.l.b16 %v2250
    %v2383 = vunpack.c.l.b16 %v2251
    %v2384 = vunpack.c.l.b16 %v2252
    %v2385 = vunpack.c.l.b16 %v2253
    %v2386 = vpack.c.b16 %v2323, %v2322
    %v2387 = vpack.c.b16 %v2325, %v2324
    %v2388 = vpack.c.b16 %v2327, %v2326
    %v2389 = vpack.c.b16 %v2329, %v2328
    %v2390 = vpack.c.b16 %v2331, %v2330
    %v2391 = vpack.c.b16 %v2333, %v2332
    %v2392 = vpack.c.b16 %v2335, %v2334
    %v2393 = vpack.c.b16 %v2337, %v2336
    %v2394 = vpack.c.b16 %v2339, %v2338
    %v2395 = vpack.c.b16 %v2341, %v2340
    %v2396 = vpack.c.b16 %v2343, %v2342
    %v2397 = vpack.c.b16 %v2345, %v2344
    %v2398 = vpack.c.b16 %v2347, %v2346
    %v2399 = vpack.c.b16 %v2349, %v2348
    %v2400 = vpack.c.b16 %v2351, %v2350
    %v2401 = vpack.c.b16 %v2353, %v2352
    %v2402 = vpack.c.b16 %v2355, %v2354
    %v2403 = vpack.c.b16 %v2357, %v2356
    %v2404 = vpack.c.b16 %v2359, %v2358
    %v2405 = vpack.c.b16 %v2361, %v2360
    %v2406 = vpack.c.b16 %v2363, %v2362
    %v2407 = vpack.c.b16 %v2365, %v2364
    %v2408 = vpack.c.b16 %v2367, %v2366
    %v2409 = vpack.c.b16 %v2369, %v2368
    %v2410 = vpack.c.b16 %v2371, %v2370
    %v2411 = vpack.c.b16 %v2373, %v2372
    %v2412 = vpack.c.b16 %v2375, %v2374
    %v2413 = vpack.c.b16 %v2377, %v2376
    %v2414 = vpack.c.b16 %v2379, %v2378
    %v2415 = vpack.c.b16 %v2381, %v2380
    %v2416 = vpack.c.b16 %v2383, %v2382
    %v2417 = vpack.c.b16 %v2385, %v2384
    %2450 = vmatpush.bf16.msra.mxu0 %v2393
    %2451 = vmatpush.bf16.msra.mxu0 %v2392
    %2452 = vmatpush.bf16.msra.mxu0 %v2391
    %2453 = vmatpush.bf16.msra.mxu0 %v2390
    %2454 = vmatpush.bf16.msra.mxu0 %v2389
    %2455 = vmatpush.bf16.msra.mxu0 %v2388
    %2456 = vmatpush.bf16.msra.mxu0 %v2387
    %2457 = vmatpush.bf16.msra.mxu0 %v2386
    %2458 = vmatmul.bf16.gmra.mxu0 %v2186
    %v2459 = vpop.f32.mrf.mxu0
    %v2460 = vadd.f32 %v2256, %v2459
    %v2461 = vpop.f32.mrf.mxu0
    %v2462 = vadd.f32 %v2256, %v2461
    %2463 = vdwg.mxu0
    %2464 = vmatpush.bf16.msra.mxu0 %v2401
    %2465 = vmatpush.bf16.msra.mxu0 %v2400
    %2466 = vmatpush.bf16.msra.mxu0 %v2399
    %2467 = vmatpush.bf16.msra.mxu0 %v2398
    %2468 = vmatpush.bf16.msra.mxu0 %v2397
    %2469 = vmatpush.bf16.msra.mxu0 %v2396
    %2470 = vmatpush.bf16.msra.mxu0 %v2395
    %2471 = vmatpush.bf16.msra.mxu0 %v2394
    %2472 = vmatmul.bf16.gmra.mxu0 %v2187
    %v2473 = vpop.f32.mrf.mxu0
    %v2474 = vadd.f32 %v2460, %v2473
    %v2475 = vpop.f32.mrf.mxu0
    %v2476 = vadd.f32 %v2462, %v2475
    %2477 = vdwg.mxu0
    %2478 = vmatpush.bf16.msra.mxu0 %v2409
    %2479 = vmatpush.bf16.msra.mxu0 %v2408
    %2480 = vmatpush.bf16.msra.mxu0 %v2407
    %2481 = vmatpush.bf16.msra.mxu0 %v2406
    %2482 = vmatpush.bf16.msra.mxu0 %v2405
    %2483 = vmatpush.bf16.msra.mxu0 %v2404
    %2484 = vmatpush.bf16.msra.mxu0 %v2403
    %2485 = vmatpush.bf16.msra.mxu0 %v2402
    %2486 = vmatmul.bf16.gmra.mxu0 %v2188
    %v2487 = vpop.f32.mrf.mxu0
    %v2488 = vadd.f32 %v2474, %v2487
    %v2489 = vpop.f32.mrf.mxu0
    %v2490 = vadd.f32 %v2476, %v2489
    %2491 = vdwg.mxu0
    %2492 = vmatpush.bf16.msra.mxu0 %v2417
    %2493 = vmatpush.bf16.msra.mxu0 %v2416
    %2494 = vmatpush.bf16.msra.mxu0 %v2415
    %2495 = vmatpush.bf16.msra.mxu0 %v2414
    %2496 = vmatpush.bf16.msra.mxu0 %v2413
    %2497 = vmatpush.bf16.msra.mxu0 %v2412
    %2498 = vmatpush.bf16.msra.mxu0 %v2411
    %2499 = vmatpush.bf16.msra.mxu0 %v2410
    %2500 = vmatmul.bf16.gmra.mxu0 %v2189
    %v2501 = vpop.f32.mrf.mxu0
    %v2502 = vadd.f32 %v2488, %v2501
    %v2503 = vpop.f32.mrf.mxu0
    %v2504 = vadd.f32 %v2490, %v2503
    %2505 = vdwg.mxu0
    %v2506 = vmax.f32 %v2502, 0.0
    %v2507 = vmax.f32 %v2504, 0.0
    %v2508 = vld [vmem:[%s5] sm:$0x1]
    %v2510 = vperm.slane %v2508, 0
    %v2512 = vmul.f32 %v2506, %v2510
    %v2513 = vmul.f32 %v2507, %v2510
    %2514 = vadd.xlane.f32.xlu0 %v2512
    %v2515 = vpop.xlane.xlu0 %2514
    %2516 = vadd.xlane.f32.xlu0 %v2513
    %v2517 = vpop.xlane.xlu0 %2516
    %v2518 = vld [vmem:[#allocation2] sm:$0x1]
    %v2520 = vperm.slane %v2518, 0
    %v2522 = vadd.f32 %v2515, %v2520
    %v2523 = vadd.f32 %v2517, %v2520
    %v2524 = vtanh.pop %v2522
    %v2525 = vtanh.pop %v2523
    %vm2526 = vcmask 7168
    %2527 = vst.msk [vmem:[#allocation10] sm:$0xff] %vm2526, %v2524
    %2528 = vst.msk [vmem:[#allocation10 + $0x8] sm:$0xff] %vm2526, %v2525
    // Predicated region
    $region46: #{tpu_custom_call.1} parent=1 // pred_check
      _
    $region47: #{tpu_custom_call.1} parent=1 // pred_check_branch
      %2530 = sbr.rel (0) target = $region49
    $region48: #{tpu_custom_call.1} parent=1 // pred_region
      // Predicated region
      $region50: #{tpu_custom_call.1} parent=48 // pred_check
        _
      $region51: #{tpu_custom_call.1} parent=48 // pred_check_branch
        %2532 = sbr.rel (0) target = $region53
      $region52: #{tpu_custom_call.1} parent=48 // pred_region
        // Predicated region
        $region54: #{tpu_custom_call.1} parent=52 // pred_check
          _
        $region55: #{tpu_custom_call.1} parent=52 // pred_check_branch
          %2534 = sbr.rel target = $region57
        $region56: #{tpu_custom_call.1} parent=52 // pred_region
          // Predicated region
          $region69: #{tpu_custom_call.1} parent=56 // pred_check
            _
          $region70: #{tpu_custom_call.1} parent=56 // pred_check_branch
            %2550 = sbr.rel (0) target = $region72
          $region71: #{tpu_custom_call.1} parent=56 // pred_region
            %s2552 = ssub.s32 4, 1
            loop: start=0, step=1, limit=1
            $region73: #{tpu_custom_call.1} parent=71 // loop_pre_header
              _
            $region74: #{tpu_custom_call.1} parent=71 // loop_header
              %s2554 = sphi 0, %s2558
              %p2555 = scmp.ge.s32.totalorder %s2554, 1
              %s2559 = sphi [#allocation10], [#allocation10]
              %s2560 = sphi %s7, %s7
            $region75: #{tpu_custom_call.1} parent=71 // loop_header_branch
              %2557 = sbr.rel (%p2555) target = $region79
            $region76: #{tpu_custom_call.1} parent=71 // loop_body
              %v2561 = vld [vmem:[%s2559] sm:%s2552]
              %2562 = vst [vmem:[%s2560] sm:%s2552] %v2561
            $region77: #{tpu_custom_call.1} parent=71 // loop_footer
              %s2558 = sadd.s32 1, %s2554
            $region78: #{tpu_custom_call.1} parent=71 // loop_footer_branch
              %2553 = sbr.rel target = $region74
            $region79: #{tpu_custom_call.1} parent=71 // loop_exit
              _
          $region72: #{tpu_custom_call.1} parent=56 // pred_fallthru
            _
        $region57: #{tpu_custom_call.1} parent=52 // pred_fallthru
          _
        // Predicated region
        $region58: #{tpu_custom_call.1} parent=52 // pred_check
          _
        $region59: #{tpu_custom_call.1} parent=52 // pred_check_branch
          %2536 = sbr.rel (0) target = $region61
        $region60: #{tpu_custom_call.1} parent=52 // pred_region
          %s2538 = ssub.s32 4, 1
          loop: start=0, step=1, limit=1
          $region62: #{tpu_custom_call.1} parent=60 // loop_pre_header
            _
          $region63: #{tpu_custom_call.1} parent=60 // loop_header
            %s2540 = sphi 0, %s2544
            %p2541 = scmp.ge.s32.totalorder %s2540, 1
            %s2545 = sphi [#allocation10], [#allocation10]
            %s2546 = sphi %s7, %s7
          $region64: #{tpu_custom_call.1} parent=60 // loop_header_branch
            %2543 = sbr.rel (%p2541) target = $region68
          $region65: #{tpu_custom_call.1} parent=60 // loop_body
            %v2547 = vld [vmem:[%s2545] sm:%s2538]
            %2548 = vst [vmem:[%s2546] sm:%s2538] %v2547
          $region66: #{tpu_custom_call.1} parent=60 // loop_footer
            %s2544 = sadd.s32 1, %s2540
          $region67: #{tpu_custom_call.1} parent=60 // loop_footer_branch
            %2539 = sbr.rel target = $region63
          $region68: #{tpu_custom_call.1} parent=60 // loop_exit
            _
        $region61: #{tpu_custom_call.1} parent=52 // pred_fallthru
          _
      $region53: #{tpu_custom_call.1} parent=48 // pred_fallthru
        _
      %2563 = vnop
    $region49: #{tpu_custom_call.1} parent=1 // pred_fallthru
      _
    // Predicated region
    $region80: #{tpu_custom_call.1} parent=1 // pred_check
      _
    $region81: #{tpu_custom_call.1} parent=1 // pred_check_branch
      %2565 = sbr.rel (0) target = $region83
    $region82: #{tpu_custom_call.1} parent=1 // pred_region
      _
    $region83: #{tpu_custom_call.1} parent=1 // pred_fallthru
      _
    %2566 = vsyncpa [#allocation4], 1
    %2567 = vsyncpa [#allocation6], 1
    %2568 = vsyncpa [#allocation9], 1

</llo_original>
